<compile_context>
chip_gen: v7x
topology: tpu7x:2x2x1
jax: 0.10.0
libtpu: 0.0.40
codegen_flags: <defaults>
</compile_context>

<pallas_src>
import jax
import jax.numpy as jnp
from jax.experimental import pallas as pl
from jax.experimental.pallas import tpu as pltpu

# ---------------- problem sizes (small, consistent with the forward) ----------
N = 2            # batch
C_IN = 8         # conv_transpose in channels
C_OUT = 16       # conv_transpose out channels
K = 3            # kernel size == stride (non-overlapping patches)
H = W = 8        # input spatial
OH, OW = K * H, K * W          # 24, 24
LIN_IN = OW                    # 24  (see TODO above)
LIN_OUT = 32
NHW = N * H * W                # 128  -> lane-dense contraction dim
NHJ = N * H * LIN_OUT          # 512  -> lane-dense output width (4 * 128)


# ----------------------- one-time weight prepacking ---------------------------
def prepack_params(conv_w, conv_b, lin_w, lin_b):
    """Host-side, one-time repacking of PyTorch-layout weights.

    Returns
      wt_mat : (K*C_OUT*K, C_IN+1) = (144, 9)
               rows ordered (kw, co, kh); column 8 holds the conv bias
               (contracted against a ones row appended to the x slab).
      bmat   : (K, N*H*W, N*H*LIN_OUT) = (3, 128, 512)
               batch-block-diagonal scatter + linear weight, hardswish 1/6 folded in:
               bmat[kw, n*64 + h*8 + w, n*256 + h*32 + j] = lin_w[j, 3w+kw] / 6
      lb     : (1, N*H*LIN_OUT) = (1, 512)  linear bias tiled over (n, h)

    NOTE: bmat/lb are specialized to the batch size N; re-run prepack if N changes.
    """
    # conv_w is PyTorch ConvTranspose2d layout (C_IN, C_OUT, K, K)
    w_core = jnp.transpose(conv_w, (3, 1, 2, 0)).reshape(K * C_OUT * K, C_IN)   # (144, 8)
    cb_col = jnp.tile(jnp.repeat(conv_b, K), K)[:, None]                         # (144, 1)
    wt_mat = jnp.concatenate([w_core, cb_col], axis=1)                           # (144, 9)

    # lin_w: (LIN_OUT, OW) with ow = 3*w + kw ; 1/6 of the hardswish prefolded here
    lw_k = lin_w.T.reshape(W, K, LIN_OUT) * (1.0 / 6.0)                          # [w, kw, j]
    eye_nh = jnp.eye(N * H, dtype=lin_w.dtype)
    bmat = jnp.stack(
        [jnp.kron(eye_nh, lw_k[:, kw, :]) for kw in range(K)], axis=0
    )                                                                             # (3, 128, 512)
    lb = jnp.tile(lin_b, N * H)[None, :]                                          # (1, 512)
    return wt_mat, bmat, lb


# ------------------------------ fused kernel ----------------------------------
def fused_kernel(x_ref, wt_ref, b_ref, lb_ref, out_ref):
    # x_ref : (C_IN+1, N*H*W) = (9, 128)    input pixels + ones row (for conv bias)
    # wt_ref: (K*C_OUT*K, C_IN+1) = (144,9) convT weight rows (kw, co, kh) + bias col
    # b_ref : (K, 128, 512)                 block-diag scatter+linear weight (1/6 folded)
    # lb_ref: (1, 512)                      linear bias tiled over (n, h)
    # out_ref: (C_OUT*K, N*H*LIN_OUT) = (48, 512)  rows (co, kh), cols (n, h, j)
    rows = out_ref.shape[0]                                   # 48

    # conv-transpose (bias folded) as one MXU matmul over all batches
    v1 = jnp.dot(wt_ref[...], x_ref[...], preferred_element_type=jnp.float32)  # (144, 128)
    # hardswish * 6  (the 1/6 lives in b_ref)
    v6 = v1 * jnp.clip(v1 + 3.0, 0.0, 6.0)

    # linear over output width: contract (w, kw); accumulate straight into out_ref (VMEM)
    out_ref[...] = lb_ref[...] + jnp.dot(
        v6[0 * rows:1 * rows, :], b_ref[0], preferred_element_type=jnp.float32)
    out_ref[...] += jnp.dot(
        v6[1 * rows:2 * rows, :], b_ref[1], preferred_element_type=jnp.float32)
    out_ref[...] += jnp.dot(
        v6[2 * rows:3 * rows, :], b_ref[2], preferred_element_type=jnp.float32)


def model_forward(x, wt_mat, bmat, lb):
    """x: (N, C_IN, H, W) f32, prepacked weights -> (N, C_OUT, OH, LIN_OUT) f32."""
    n, c_in, h, w = x.shape
    assert (n, c_in, h, w) == (N, C_IN, H, W)

    # lane-dense input slab: (C_IN, N*H*W), ones row appended for the conv bias (~4 KB op)
    xs = x.transpose(1, 0, 2, 3).reshape(C_IN, NHW)
    xs = jnp.concatenate([xs, jnp.ones((1, NHW), xs.dtype)], axis=0)   # (9, 128)

    vmem = pltpu.MemorySpace.VMEM
    out_mat = pl.pallas_call(
        fused_kernel,
        out_shape=jax.ShapeDtypeStruct((C_OUT * K, NHJ), jnp.float32),
        in_specs=[pl.BlockSpec(memory_space=vmem)] * 4,
        out_specs=pl.BlockSpec(memory_space=vmem),
    )(xs, wt_mat, bmat, lb)

    # layout plumbing only (fuses inside the jit; keeps the kernel store lane-dense):
    # out_mat[(co, kh), (n, h, j)] -> out[n, co, 3h+kh, j]
    out = (
        out_mat.reshape(C_OUT, K, N, H, LIN_OUT)
        .transpose(2, 0, 3, 1, 4)
        .reshape(N, C_OUT, OH, LIN_OUT)
    )
    return out


# ------------------------------ pure-JAX reference ----------------------------
def reference_forward(x, conv_w, conv_b, lin_w, lin_b):
    """stride==kernel transposed conv has no overlaps -> direct patch scatter."""
    n = x.shape[0]
    v1 = jnp.einsum("nchw,cokl->nohkwl", x, conv_w).reshape(n, C_OUT, OH, OW)
    v1 = v1 + conv_b[None, :, None, None]
    v6 = v1 * jnp.clip(v1 + 3.0, 0.0, 6.0) / 6.0
    return jnp.einsum("nohw,jw->nohj", v6, lin_w) + lin_b


if __name__ == "__main__":
    key = jax.random.PRNGKey(0)
    kx, kw1, kb1, kw2, kb2 = jax.random.split(key, 5)

    x = jax.random.normal(kx, (N, C_IN, H, W), dtype=jnp.float32)
    # ConvTranspose2d(8, 16, 3): weight shape (in, out, k, k), bias (out,)
    conv_w = 0.1 * jax.random.normal(kw1, (C_IN, C_OUT, K, K), dtype=jnp.float32)
    conv_b = 0.1 * jax.random.normal(kb1, (C_OUT,), dtype=jnp.float32)
    # Linear(LIN_IN, 32): weight shape (out, in), bias (out,)
    lin_w = 0.1 * jax.random.normal(kw2, (LIN_OUT, LIN_IN), dtype=jnp.float32)
    lin_b = 0.1 * jax.random.normal(kb2, (LIN_OUT,), dtype=jnp.float32)

    # one-time prepack (outside the per-call path)
    packed = prepack_params(conv_w, conv_b, lin_w, lin_b)
    packed = jax.tree_util.tree_map(jax.block_until_ready, packed)

    fwd = jax.jit(model_forward)
    out = jax.block_until_ready(fwd(x, *packed))

    ref = reference_forward(x, conv_w, conv_b, lin_w, lin_b)
    assert out.shape == (N, C_OUT, OH, LIN_OUT), out.shape
    assert jnp.allclose(out, ref, rtol=1e-2, atol=1e-3), float(
        jnp.max(jnp.abs(out - ref))
    )
    print("KERNEL_OK")
</pallas_src>

<mosaic_0001>
module attributes {stable_mosaic.version = 11 : i64} {
  func.func @fused_kernel(%arg0: memref<9x128xf32, #tpu.memory_space<vmem>>, %arg1: memref<144x9xf32, #tpu.memory_space<vmem>>, %arg2: memref<3x128x512xf32, #tpu.memory_space<vmem>>, %arg3: memref<1x512xf32, #tpu.memory_space<vmem>>, %arg4: memref<48x512xf32, #tpu.memory_space<vmem>>) attributes {dimension_semantics = [], scalar_prefetch = 0 : i64, scratch_operands = 0 : i64, tpu.core_type = #tpu.core_type<tc>} {
    %c0 = arith.constant 0 : index
    %c0_0 = arith.constant 0 : index
    %0 = vector.load %arg1[%c0, %c0_0] : memref<144x9xf32, #tpu.memory_space<vmem>>, vector<144x9xf32>
    %c0_1 = arith.constant 0 : index
    %c0_2 = arith.constant 0 : index
    %1 = vector.load %arg0[%c0_1, %c0_2] : memref<9x128xf32, #tpu.memory_space<vmem>>, vector<9x128xf32>
    %cst = arith.constant dense<0.000000e+00> : vector<144x128xf32>
    %2 = tpu.matmul %0, %1, %cst {dimension_numbers = #tpu.dot_dimension_numbers<[1], [0], [0], [1], [0, 0, 1, 1], [], []>} : vector<144x9xf32>, vector<9x128xf32>, vector<144x128xf32> -> vector<144x128xf32>
    %cst_3 = arith.constant 3.000000e+00 : f32
    %3 = vector.broadcast %cst_3 : f32 to vector<144x128xf32>
    %4 = arith.addf %2, %3 : vector<144x128xf32>
    %cst_4 = arith.constant 0.000000e+00 : f32
    %cst_5 = arith.constant 6.000000e+00 : f32
    %5 = vector.broadcast %cst_4 : f32 to vector<144x128xf32>
    %6 = arith.maximumf %5, %4 : vector<144x128xf32>
    %7 = vector.broadcast %cst_5 : f32 to vector<144x128xf32>
    %8 = arith.minimumf %7, %6 : vector<144x128xf32>
    %9 = arith.mulf %2, %8 : vector<144x128xf32>
    %c0_6 = arith.constant 0 : index
    %c0_7 = arith.constant 0 : index
    %10 = vector.load %arg3[%c0_6, %c0_7] : memref<1x512xf32, #tpu.memory_space<vmem>>, vector<1x512xf32>
    %11 = vector.extract_strided_slice %9 {offsets = [0, 0], sizes = [48, 128], strides = [1, 1]} : vector<144x128xf32> to vector<48x128xf32>
    %c0_8 = arith.constant 0 : index
    %c0_9 = arith.constant 0 : index
    %c0_10 = arith.constant 0 : index
    %12 = vector.load %arg2[%c0_8, %c0_9, %c0_10] : memref<3x128x512xf32, #tpu.memory_space<vmem>>, vector<1x128x512xf32>
    %13 = vector.shape_cast %12 : vector<1x128x512xf32> to vector<128x512xf32>
    %cst_11 = arith.constant dense<0.000000e+00> : vector<48x512xf32>
    %14 = tpu.matmul %11, %13, %cst_11 {dimension_numbers = #tpu.dot_dimension_numbers<[1], [0], [0], [1], [0, 0, 1, 1], [], []>} : vector<48x128xf32>, vector<128x512xf32>, vector<48x512xf32> -> vector<48x512xf32>
    %15 = vector.broadcast %10 : vector<1x512xf32> to vector<48x512xf32>
    %16 = arith.addf %15, %14 : vector<48x512xf32>
    %c0_12 = arith.constant 0 : index
    %c0_13 = arith.constant 0 : index
    %17 = vector.load %arg4[%c0_12, %c0_13] : memref<48x512xf32, #tpu.memory_space<vmem>>, vector<48x512xf32>
    tpu.vector_store %arg4[%c0_12, %c0_13], %16 {strides = array<i32>} : memref<48x512xf32, #tpu.memory_space<vmem>>, vector<48x512xf32>,
    %c0_14 = arith.constant 0 : index
    %c0_15 = arith.constant 0 : index
    %18 = vector.load %arg4[%c0_14, %c0_15] : memref<48x512xf32, #tpu.memory_space<vmem>>, vector<48x512xf32>
    %19 = vector.extract_strided_slice %9 {offsets = [48, 0], sizes = [48, 128], strides = [1, 1]} : vector<144x128xf32> to vector<48x128xf32>
    %c1 = arith.constant 1 : index
    %c0_16 = arith.constant 0 : index
    %c0_17 = arith.constant 0 : index
    %20 = vector.load %arg2[%c1, %c0_16, %c0_17] : memref<3x128x512xf32, #tpu.memory_space<vmem>>, vector<1x128x512xf32>
    %21 = vector.shape_cast %20 : vector<1x128x512xf32> to vector<128x512xf32>
    %cst_18 = arith.constant dense<0.000000e+00> : vector<48x512xf32>
    %22 = tpu.matmul %19, %21, %cst_18 {dimension_numbers = #tpu.dot_dimension_numbers<[1], [0], [0], [1], [0, 0, 1, 1], [], []>} : vector<48x128xf32>, vector<128x512xf32>, vector<48x512xf32> -> vector<48x512xf32>
    %23 = arith.addf %18, %22 : vector<48x512xf32>
    %c0_19 = arith.constant 0 : index
    %c0_20 = arith.constant 0 : index
    %24 = vector.load %arg4[%c0_19, %c0_20] : memref<48x512xf32, #tpu.memory_space<vmem>>, vector<48x512xf32>
    tpu.vector_store %arg4[%c0_19, %c0_20], %23 {strides = array<i32>} : memref<48x512xf32, #tpu.memory_space<vmem>>, vector<48x512xf32>,
    %c0_21 = arith.constant 0 : index
    %c0_22 = arith.constant 0 : index
    %25 = vector.load %arg4[%c0_21, %c0_22] : memref<48x512xf32, #tpu.memory_space<vmem>>, vector<48x512xf32>
    %26 = vector.extract_strided_slice %9 {offsets = [96, 0], sizes = [48, 128], strides = [1, 1]} : vector<144x128xf32> to vector<48x128xf32>
    %c2 = arith.constant 2 : index
    %c0_23 = arith.constant 0 : index
    %c0_24 = arith.constant 0 : index
    %27 = vector.load %arg2[%c2, %c0_23, %c0_24] : memref<3x128x512xf32, #tpu.memory_space<vmem>>, vector<1x128x512xf32>
    %28 = vector.shape_cast %27 : vector<1x128x512xf32> to vector<128x512xf32>
    %cst_25 = arith.constant dense<0.000000e+00> : vector<48x512xf32>
    %29 = tpu.matmul %26, %28, %cst_25 {dimension_numbers = #tpu.dot_dimension_numbers<[1], [0], [0], [1], [0, 0, 1, 1], [], []>} : vector<48x128xf32>, vector<128x512xf32>, vector<48x512xf32> -> vector<48x512xf32>
    %30 = arith.addf %25, %29 : vector<48x512xf32>
    %c0_26 = arith.constant 0 : index
    %c0_27 = arith.constant 0 : index
    %31 = vector.load %arg4[%c0_26, %c0_27] : memref<48x512xf32, #tpu.memory_space<vmem>>, vector<48x512xf32>
    tpu.vector_store %arg4[%c0_26, %c0_27], %30 {strides = array<i32>} : memref<48x512xf32, #tpu.memory_space<vmem>>, vector<48x512xf32>,
    return
  }
}

</mosaic_0001>

<llo_original>
// kernel: model_forward.1
$region0: #{model_forward.1}
  #allocation0 [shape = 'u32[]', space=smem, size = 0x4, offset = 0x4, fixed_abs, tag = 'smem constant byte address 0x4 - core index']
  #allocation1 [shape = 'u32[144,128]{1,0:T(1,128)}', space=vmem, size = 0x12000, scoped, tag = 'internal scratch']
  %s0 = inlined_call_operand.vmem [shape: f32[9,128], index: 0, kind: input, shape index: {}]
  %s1 = inlined_call_operand.vmem [shape: f32[144,9], index: 1, kind: input, shape index: {}]
  %s2 = inlined_call_operand.hbm [shape: f32[3,128,512], index: 2, kind: input, shape index: {}]
  %s3 = inlined_call_operand.vmem [shape: f32[1,512], index: 3, kind: input, shape index: {}]
  %s4 = inlined_call_operand.vmem [shape: f32[48,512], index: 4, kind: output, shape index: {}]
  %s5 = sld [smem:[#allocation0]]
  $region30: #{model_forward.1} parent=0
    _
  %s7 = ssub.s32 1, %s5
  %s8 = scalar_select 0, %s7, %s5
  $region1: #{model_forward.1} parent=0
    #allocation2 [shape = 'u8[786432]{0}', space=vmem, size = 0xc0000, scoped, tag = 'input window, operand 2, single buffered']
    #allocation3 [shape = 's32[1]{0}', space=sflag, size = 0x4, scoped, tag = 'scoped memory for model_forward.1']
    %9 = vsyncpa [#allocation3], 0
    // Predicated region
    $region2: #{model_forward.1} parent=1 // pred_check
      _
    $region3: #{model_forward.1} parent=1 // pred_check_branch
      %11 = sbr.rel (0) target = $region5
    $region4: #{model_forward.1} parent=1 // pred_region
      _
    $region5: #{model_forward.1} parent=1 // pred_fallthru
      _
    // Predicated region
    $region6: #{model_forward.1} parent=1 // pred_check
      _
    $region7: #{model_forward.1} parent=1 // pred_check_branch
      %13 = sbr.rel (0) target = $region9
    $region8: #{model_forward.1} parent=1 // pred_region
      _
    $region9: #{model_forward.1} parent=1 // pred_fallthru
      _
    // Predicated region
    $region10: #{model_forward.1} parent=1 // pred_check
      _
    $region11: #{model_forward.1} parent=1 // pred_check_branch
      %15 = sbr.rel (0) target = $region13
    $region12: #{model_forward.1} parent=1 // pred_region
      %s17 = ssub.s32 24576, 24576
      %18 = vsyncadd [#allocation3], %s17
      %s19 = sshll.u32 [#allocation2], 4
      %s20 = int_to_ptr.vmem [resolvable:$true] %s19
      %25 = dma.hbm_to_vmem [thread:$0]  %s2, 24576, %s20, [#allocation3], 512, 512, 32
    $region13: #{model_forward.1} parent=1 // pred_fallthru
      _
    // Predicated region
    $region14: #{model_forward.1} parent=1 // pred_check
      _
    $region15: #{model_forward.1} parent=1 // pred_check_branch
      %27 = sbr.rel (0) target = $region17
    $region16: #{model_forward.1} parent=1 // pred_region
      _
    $region17: #{model_forward.1} parent=1 // pred_fallthru
      _
    // Predicated region
    $region18: #{model_forward.1} parent=1 // pred_check
      _
    $region19: #{model_forward.1} parent=1 // pred_check_branch
      %29 = sbr.rel (0) target = $region21
    $region20: #{model_forward.1} parent=1 // pred_region
      %30 = dma.done [#allocation3], 24576
    $region21: #{model_forward.1} parent=1 // pred_fallthru
      _
    %v31 = vld [vmem:[%s1] sm:$0xff]
    %v32 = vld [vmem:[%s1 + $0x8] sm:$0xff]
    %v33 = vld [vmem:[%s1 + $0x10] sm:$0xff]
    %v34 = vld [vmem:[%s1 + $0x18] sm:$0xff]
    %v35 = vld [vmem:[%s1 + $0x20] sm:$0xff]
    %v36 = vld [vmem:[%s1 + $0x28] sm:$0xff]
    %v37 = vld [vmem:[%s1 + $0x30] sm:$0xff]
    %v38 = vld [vmem:[%s1 + $0x38] sm:$0xff]
    %v39 = vld [vmem:[%s1 + $0x40] sm:$0xff]
    %v40 = vld [vmem:[%s1 + $0x48] sm:$0xff]
    %v41 = vld [vmem:[%s1 + $0x50] sm:$0xff]
    %v42 = vld [vmem:[%s1 + $0x58] sm:$0xff]
    %v43 = vld [vmem:[%s1 + $0x60] sm:$0xff]
    %v44 = vld [vmem:[%s1 + $0x68] sm:$0xff]
    %v45 = vld [vmem:[%s1 + $0x70] sm:$0xff]
    %v46 = vld [vmem:[%s1 + $0x78] sm:$0xff]
    %v47 = vld [vmem:[%s1 + $0x80] sm:$0xff]
    %v48 = vld [vmem:[%s1 + $0x88] sm:$0xff]
    %v49 = vld [vmem:[%s0] sm:$0xff]
    %v50 = vld [vmem:[%s0 + $0x8] sm:$0x1]
    %vm51 = vcmask 72704
    %v53 = vsel %vm51, %v31, 0
    %v56 = vsel %vm51, %v32, 0
    %v59 = vsel %vm51, %v33, 0
    %v62 = vsel %vm51, %v34, 0
    %v65 = vsel %vm51, %v35, 0
    %v68 = vsel %vm51, %v36, 0
    %v71 = vsel %vm51, %v37, 0
    %v74 = vsel %vm51, %v38, 0
    %v77 = vsel %vm51, %v39, 0
    %v80 = vsel %vm51, %v40, 0
    %v83 = vsel %vm51, %v41, 0
    %v86 = vsel %vm51, %v42, 0
    %v89 = vsel %vm51, %v43, 0
    %v92 = vsel %vm51, %v44, 0
    %v95 = vsel %vm51, %v45, 0
    %v98 = vsel %vm51, %v46, 0
    %v101 = vsel %vm51, %v47, 0
    %v104 = vsel %vm51, %v48, 0
    %vm106 = vcmask 1040384
    %v108 = vsel %vm106, %v50, 0
    %110 = vmatprep.subr.mxu0 0.0
    %111 = vmatpush1.msra.mxu0 %v49
    %112 = vmatprep.subr.mxu0 0.0
    %113 = vmatpush1.msra.mxu0 %v108
    %114 = vmatprep.subr.mxu0 0.0
    %115 = vmatpush1.msra.mxu0 0.0
    %116 = vmatprep.subr.mxu0 0.0
    %117 = vmatpush1.msra.mxu0 0.0
    %118 = vmatprep.subr.mxu0 0.0
    %119 = vmatpush1.msra.mxu0 0.0
    %120 = vmatprep.subr.mxu0 0.0
    %121 = vmatpush1.msra.mxu0 0.0
    %122 = vmatprep.subr.mxu0 0.0
    %123 = vmatpush1.msra.mxu0 0.0
    %124 = vmatprep.subr.mxu0 0.0
    %125 = vmatpush1.msra.mxu0 0.0
    %126 = vmatprep.subr.mxu0 0.0
    %127 = vmatpush1.msra.mxu0 0.0
    %128 = vmatprep.subr.mxu0 0.0
    %129 = vmatpush1.msra.mxu0 0.0
    %130 = vmatprep.subr.mxu0 0.0
    %131 = vmatpush1.msra.mxu0 0.0
    %132 = vmatprep.subr.mxu0 0.0
    %133 = vmatpush1.msra.mxu0 0.0
    %134 = vmatprep.subr.mxu0 0.0
    %135 = vmatpush1.msra.mxu0 0.0
    %136 = vmatprep.subr.mxu0 0.0
    %137 = vmatpush1.msra.mxu0 0.0
    %138 = vmatprep.subr.mxu0 0.0
    %139 = vmatpush1.msra.mxu0 0.0
    %140 = vmatprep.subr.mxu0 0.0
    %141 = vmatpush1.msra.mxu0 0.0
    %142 = vmatprep.subr.mxu0 0.0
    %143 = vmatpush1.msra.mxu0 0.0
    %144 = vmatprep.subr.mxu0 0.0
    %145 = vmatpush1.msra.mxu0 0.0
    %146 = vmatprep.subr.mxu0 0.0
    %147 = vmatpush1.msra.mxu0 0.0
    %148 = vmatprep.subr.mxu0 0.0
    %149 = vmatpush1.msra.mxu0 0.0
    %150 = vmatprep.subr.mxu0 0.0
    %151 = vmatpush1.msra.mxu0 0.0
    %152 = vmatprep.subr.mxu0 0.0
    %153 = vmatpush1.msra.mxu0 0.0
    %154 = vmatprep.subr.mxu0 0.0
    %155 = vmatpush1.msra.mxu0 0.0
    %156 = vmatprep.subr.mxu0 0.0
    %157 = vmatpush1.msra.mxu0 0.0
    %158 = vmatprep.subr.mxu0 0.0
    %159 = vmatpush1.msra.mxu0 0.0
    %160 = vmatprep.subr.mxu0 0.0
    %161 = vmatpush1.msra.mxu0 0.0
    %162 = vmatprep.subr.mxu0 0.0
    %163 = vmatpush1.msra.mxu0 0.0
    %164 = vmatprep.subr.mxu0 0.0
    %165 = vmatpush1.msra.mxu0 0.0
    %166 = vmatprep.subr.mxu0 0.0
    %167 = vmatpush1.msra.mxu0 0.0
    %168 = vmatprep.subr.mxu0 0.0
    %169 = vmatpush1.msra.mxu0 0.0
    %170 = vmatprep.subr.mxu0 0.0
    %171 = vmatpush1.msra.mxu0 0.0
    %172 = vmatprep.subr.mxu0 0.0
    %173 = vmatpush1.msra.mxu0 0.0
    %174 = vmatprep.mubr.f32.mxu0 0.0
    %175 = vmatmul.mubr.f32.gmra.mrb[0].mxu0 %v53
    %v176 = vpop.f32.mrb[0].mxu0
    %v177 = vadd.f32 0.0, %v176
    %v178 = vpop.f32.mrb[0].mxu0
    %179 = vmatprep.mubr.f32.mxu0 0.0
    %180 = vmatmul.mubr.f32.gmra.mrb[0].mxu0 %v56
    %v181 = vpop.f32.mrb[0].mxu0
    %v182 = vadd.f32 0.0, %v181
    %v183 = vpop.f32.mrb[0].mxu0
    %184 = vmatprep.mubr.f32.mxu0 0.0
    %185 = vmatmul.mubr.f32.gmra.mrb[0].mxu0 %v59
    %v186 = vpop.f32.mrb[0].mxu0
    %v187 = vadd.f32 0.0, %v186
    %v188 = vpop.f32.mrb[0].mxu0
    %189 = vmatprep.mubr.f32.mxu0 0.0
    %190 = vmatmul.mubr.f32.gmra.mrb[0].mxu0 %v62
    %v191 = vpop.f32.mrb[0].mxu0
    %v192 = vadd.f32 0.0, %v191
    %v193 = vpop.f32.mrb[0].mxu0
    %194 = vmatprep.mubr.f32.mxu0 0.0
    %195 = vmatmul.mubr.f32.gmra.mrb[0].mxu0 %v65
    %v196 = vpop.f32.mrb[0].mxu0
    %v197 = vadd.f32 0.0, %v196
    %v198 = vpop.f32.mrb[0].mxu0
    %199 = vmatprep.mubr.f32.mxu0 0.0
    %200 = vmatmul.mubr.f32.gmra.mrb[0].mxu0 %v68
    %v201 = vpop.f32.mrb[0].mxu0
    %v202 = vadd.f32 0.0, %v201
    %v203 = vpop.f32.mrb[0].mxu0
    %204 = vmatprep.mubr.f32.mxu0 0.0
    %205 = vmatmul.mubr.f32.gmra.mrb[0].mxu0 %v71
    %v206 = vpop.f32.mrb[0].mxu0
    %v207 = vadd.f32 0.0, %v206
    %v208 = vpop.f32.mrb[0].mxu0
    %209 = vmatprep.mubr.f32.mxu0 0.0
    %210 = vmatmul.mubr.f32.gmra.mrb[0].mxu0 %v74
    %v211 = vpop.f32.mrb[0].mxu0
    %v212 = vadd.f32 0.0, %v211
    %v213 = vpop.f32.mrb[0].mxu0
    %214 = vmatprep.mubr.f32.mxu0 0.0
    %215 = vmatmul.mubr.f32.gmra.mrb[0].mxu0 %v77
    %v216 = vpop.f32.mrb[0].mxu0
    %v217 = vadd.f32 0.0, %v216
    %v218 = vpop.f32.mrb[0].mxu0
    %219 = vmatprep.mubr.f32.mxu0 0.0
    %220 = vmatmul.mubr.f32.gmra.mrb[0].mxu0 %v80
    %v221 = vpop.f32.mrb[0].mxu0
    %v222 = vadd.f32 0.0, %v221
    %v223 = vpop.f32.mrb[0].mxu0
    %224 = vmatprep.mubr.f32.mxu0 0.0
    %225 = vmatmul.mubr.f32.gmra.mrb[0].mxu0 %v83
    %v226 = vpop.f32.mrb[0].mxu0
    %v227 = vadd.f32 0.0, %v226
    %v228 = vpop.f32.mrb[0].mxu0
    %229 = vmatprep.mubr.f32.mxu0 0.0
    %230 = vmatmul.mubr.f32.gmra.mrb[0].mxu0 %v86
    %v231 = vpop.f32.mrb[0].mxu0
    %v232 = vadd.f32 0.0, %v231
    %v233 = vpop.f32.mrb[0].mxu0
    %234 = vmatprep.mubr.f32.mxu0 0.0
    %235 = vmatmul.mubr.f32.gmra.mrb[0].mxu0 %v89
    %v236 = vpop.f32.mrb[0].mxu0
    %v237 = vadd.f32 0.0, %v236
    %v238 = vpop.f32.mrb[0].mxu0
    %239 = vmatprep.mubr.f32.mxu0 0.0
    %240 = vmatmul.mubr.f32.gmra.mrb[0].mxu0 %v92
    %v241 = vpop.f32.mrb[0].mxu0
    %v242 = vadd.f32 0.0, %v241
    %v243 = vpop.f32.mrb[0].mxu0
    %244 = vmatprep.mubr.f32.mxu0 0.0
    %245 = vmatmul.mubr.f32.gmra.mrb[0].mxu0 %v95
    %v246 = vpop.f32.mrb[0].mxu0
    %v247 = vadd.f32 0.0, %v246
    %v248 = vpop.f32.mrb[0].mxu0
    %249 = vmatprep.mubr.f32.mxu0 0.0
    %250 = vmatmul.mubr.f32.gmra.mrb[0].mxu0 %v98
    %v251 = vpop.f32.mrb[0].mxu0
    %v252 = vadd.f32 0.0, %v251
    %v253 = vpop.f32.mrb[0].mxu0
    %254 = vmatprep.mubr.f32.mxu0 0.0
    %255 = vmatmul.mubr.f32.gmra.mrb[0].mxu0 %v101
    %v256 = vpop.f32.mrb[0].mxu0
    %v257 = vadd.f32 0.0, %v256
    %v258 = vpop.f32.mrb[0].mxu0
    %259 = vmatprep.mubr.f32.mxu0 0.0
    %260 = vmatmul.mubr.f32.gmra.mrb[0].mxu0 %v104
    %v261 = vpop.f32.mrb[0].mxu0
    %v262 = vadd.f32 0.0, %v261
    %v263 = vpop.f32.mrb[0].mxu0
    %264 = vdwg.mxu0
    %v265 = vadd.f32 %v177, 3.0
    %v266 = vadd.f32 %v182, 3.0
    %v267 = vadd.f32 %v187, 3.0
    %v268 = vadd.f32 %v192, 3.0
    %v269 = vadd.f32 %v197, 3.0
    %v270 = vadd.f32 %v202, 3.0
    %v271 = vadd.f32 %v207, 3.0
    %v272 = vadd.f32 %v212, 3.0
    %v273 = vadd.f32 %v217, 3.0
    %v274 = vadd.f32 %v222, 3.0
    %v275 = vadd.f32 %v227, 3.0
    %v276 = vadd.f32 %v232, 3.0
    %v277 = vadd.f32 %v237, 3.0
    %v278 = vadd.f32 %v242, 3.0
    %v279 = vadd.f32 %v247, 3.0
    %v280 = vadd.f32 %v252, 3.0
    %v281 = vadd.f32 %v257, 3.0
    %v282 = vadd.f32 %v262, 3.0
    %v283 = vmax.f32 %v265, 0.0
    %v284 = vmax.f32 %v266, 0.0
    %v285 = vmax.f32 %v267, 0.0
    %v286 = vmax.f32 %v268, 0.0
    %v287 = vmax.f32 %v269, 0.0
    %v288 = vmax.f32 %v270, 0.0
    %v289 = vmax.f32 %v271, 0.0
    %v290 = vmax.f32 %v272, 0.0
    %v291 = vmax.f32 %v273, 0.0
    %v292 = vmax.f32 %v274, 0.0
    %v293 = vmax.f32 %v275, 0.0
    %v294 = vmax.f32 %v276, 0.0
    %v295 = vmax.f32 %v277, 0.0
    %v296 = vmax.f32 %v278, 0.0
    %v297 = vmax.f32 %v279, 0.0
    %v298 = vmax.f32 %v280, 0.0
    %v299 = vmax.f32 %v281, 0.0
    %v300 = vmax.f32 %v282, 0.0
    %v301 = vmin.f32 %v283, 6.0
    %v302 = vmin.f32 %v284, 6.0
    %v303 = vmin.f32 %v285, 6.0
    %v304 = vmin.f32 %v286, 6.0
    %v305 = vmin.f32 %v287, 6.0
    %v306 = vmin.f32 %v288, 6.0
    %v307 = vmin.f32 %v289, 6.0
    %v308 = vmin.f32 %v290, 6.0
    %v309 = vmin.f32 %v291, 6.0
    %v310 = vmin.f32 %v292, 6.0
    %v311 = vmin.f32 %v293, 6.0
    %v312 = vmin.f32 %v294, 6.0
    %v313 = vmin.f32 %v295, 6.0
    %v314 = vmin.f32 %v296, 6.0
    %v315 = vmin.f32 %v297, 6.0
    %v316 = vmin.f32 %v298, 6.0
    %v317 = vmin.f32 %v299, 6.0
    %v318 = vmin.f32 %v300, 6.0
    %v319 = vmul.f32 %v177, %v301
    %v320 = vmul.f32 %v182, %v302
    %v321 = vmul.f32 %v187, %v303
    %v322 = vmul.f32 %v192, %v304
    %v323 = vmul.f32 %v197, %v305
    %v324 = vmul.f32 %v202, %v306
    %v325 = vmul.f32 %v207, %v307
    %v326 = vmul.f32 %v212, %v308
    %v327 = vmul.f32 %v217, %v309
    %v328 = vmul.f32 %v222, %v310
    %v329 = vmul.f32 %v227, %v311
    %v330 = vmul.f32 %v232, %v312
    %v331 = vmul.f32 %v237, %v313
    %v332 = vmul.f32 %v242, %v314
    %v333 = vmul.f32 %v247, %v315
    %v334 = vmul.f32 %v252, %v316
    %v335 = vmul.f32 %v257, %v317
    %v336 = vmul.f32 %v262, %v318
    %v337 = vld [vmem:[%s3] sm:$0xf]
    %v338 = vld [vmem:[#allocation2] sm:$0xff]
    %v339 = vld [vmem:[#allocation2 + $0x8] sm:$0xff]
    %v340 = vld [vmem:[#allocation2 + $0x10] sm:$0xff]
    %v341 = vld [vmem:[#allocation2 + $0x18] sm:$0xff]
    %v342 = vld [vmem:[#allocation2 + $0x20] sm:$0xff]
    %v343 = vld [vmem:[#allocation2 + $0x28] sm:$0xff]
    %v344 = vld [vmem:[#allocation2 + $0x30] sm:$0xff]
    %v345 = vld [vmem:[#allocation2 + $0x38] sm:$0xff]
    %v346 = vld [vmem:[#allocation2 + $0x40] sm:$0xff]
    %v347 = vld [vmem:[#allocation2 + $0x48] sm:$0xff]
    %v348 = vld [vmem:[#allocation2 + $0x50] sm:$0xff]
    %v349 = vld [vmem:[#allocation2 + $0x58] sm:$0xff]
    %v350 = vld [vmem:[#allocation2 + $0x60] sm:$0xff]
    %v351 = vld [vmem:[#allocation2 + $0x68] sm:$0xff]
    %v352 = vld [vmem:[#allocation2 + $0x70] sm:$0xff]
    %v353 = vld [vmem:[#allocation2 + $0x78] sm:$0xff]
    %v354 = vld [vmem:[#allocation2 + $0x80] sm:$0xff]
    %v355 = vld [vmem:[#allocation2 + $0x88] sm:$0xff]
    %v356 = vld [vmem:[#allocation2 + $0x90] sm:$0xff]
    %v357 = vld [vmem:[#allocation2 + $0x98] sm:$0xff]
    %v358 = vld [vmem:[#allocation2 + $0xa0] sm:$0xff]
    %v359 = vld [vmem:[#allocation2 + $0xa8] sm:$0xff]
    %v360 = vld [vmem:[#allocation2 + $0xb0] sm:$0xff]
    %v361 = vld [vmem:[#allocation2 + $0xb8] sm:$0xff]
    %v362 = vld [vmem:[#allocation2 + $0xc0] sm:$0xff]
    %v363 = vld [vmem:[#allocation2 + $0xc8] sm:$0xff]
    %v364 = vld [vmem:[#allocation2 + $0xd0] sm:$0xff]
    %v365 = vld [vmem:[#allocation2 + $0xd8] sm:$0xff]
    %v366 = vld [vmem:[#allocation2 + $0xe0] sm:$0xff]
    %v367 = vld [vmem:[#allocation2 + $0xe8] sm:$0xff]
    %v368 = vld [vmem:[#allocation2 + $0xf0] sm:$0xff]
    %v369 = vld [vmem:[#allocation2 + $0xf8] sm:$0xff]
    %v370 = vld [vmem:[#allocation2 + $0x100] sm:$0xff]
    %v371 = vld [vmem:[#allocation2 + $0x108] sm:$0xff]
    %v372 = vld [vmem:[#allocation2 + $0x110] sm:$0xff]
    %v373 = vld [vmem:[#allocation2 + $0x118] sm:$0xff]
    %v374 = vld [vmem:[#allocation2 + $0x120] sm:$0xff]
    %v375 = vld [vmem:[#allocation2 + $0x128] sm:$0xff]
    %v376 = vld [vmem:[#allocation2 + $0x130] sm:$0xff]
    %v377 = vld [vmem:[#allocation2 + $0x138] sm:$0xff]
    %v378 = vld [vmem:[#allocation2 + $0x140] sm:$0xff]
    %v379 = vld [vmem:[#allocation2 + $0x148] sm:$0xff]
    %v380 = vld [vmem:[#allocation2 + $0x150] sm:$0xff]
    %v381 = vld [vmem:[#allocation2 + $0x158] sm:$0xff]
    %v382 = vld [vmem:[#allocation2 + $0x160] sm:$0xff]
    %v383 = vld [vmem:[#allocation2 + $0x168] sm:$0xff]
    %v384 = vld [vmem:[#allocation2 + $0x170] sm:$0xff]
    %v385 = vld [vmem:[#allocation2 + $0x178] sm:$0xff]
    %v386 = vld [vmem:[#allocation2 + $0x180] sm:$0xff]
    %v387 = vld [vmem:[#allocation2 + $0x188] sm:$0xff]
    %v388 = vld [vmem:[#allocation2 + $0x190] sm:$0xff]
    %v389 = vld [vmem:[#allocation2 + $0x198] sm:$0xff]
    %v390 = vld [vmem:[#allocation2 + $0x1a0] sm:$0xff]
    %v391 = vld [vmem:[#allocation2 + $0x1a8] sm:$0xff]
    %v392 = vld [vmem:[#allocation2 + $0x1b0] sm:$0xff]
    %v393 = vld [vmem:[#allocation2 + $0x1b8] sm:$0xff]
    %v394 = vld [vmem:[#allocation2 + $0x1c0] sm:$0xff]
    %v395 = vld [vmem:[#allocation2 + $0x1c8] sm:$0xff]
    %v396 = vld [vmem:[#allocation2 + $0x1d0] sm:$0xff]
    %v397 = vld [vmem:[#allocation2 + $0x1d8] sm:$0xff]
    %v398 = vld [vmem:[#allocation2 + $0x1e0] sm:$0xff]
    %v399 = vld [vmem:[#allocation2 + $0x1e8] sm:$0xff]
    %v400 = vld [vmem:[#allocation2 + $0x1f0] sm:$0xff]
    %v401 = vld [vmem:[#allocation2 + $0x1f8] sm:$0xff]
    %402 = vmatprep.subr.mxu0 %v339
    %403 = vmatpush1.msra.mxu0 %v338
    %404 = vmatprep.subr.mxu0 %v343
    %405 = vmatpush1.msra.mxu0 %v342
    %406 = vmatprep.subr.mxu0 %v347
    %407 = vmatpush1.msra.mxu0 %v346
    %408 = vmatprep.subr.mxu0 %v351
    %409 = vmatpush1.msra.mxu0 %v350
    %410 = vmatprep.subr.mxu0 %v355
    %411 = vmatpush1.msra.mxu0 %v354
    %412 = vmatprep.subr.mxu0 %v359
    %413 = vmatpush1.msra.mxu0 %v358
    %414 = vmatprep.subr.mxu0 %v363
    %415 = vmatpush1.msra.mxu0 %v362
    %416 = vmatprep.subr.mxu0 %v367
    %417 = vmatpush1.msra.mxu0 %v366
    %418 = vmatprep.subr.mxu0 %v371
    %419 = vmatpush1.msra.mxu0 %v370
    %420 = vmatprep.subr.mxu0 %v375
    %421 = vmatpush1.msra.mxu0 %v374
    %422 = vmatprep.subr.mxu0 %v379
    %423 = vmatpush1.msra.mxu0 %v378
    %424 = vmatprep.subr.mxu0 %v383
    %425 = vmatpush1.msra.mxu0 %v382
    %426 = vmatprep.subr.mxu0 %v387
    %427 = vmatpush1.msra.mxu0 %v386
    %428 = vmatprep.subr.mxu0 %v391
    %429 = vmatpush1.msra.mxu0 %v390
    %430 = vmatprep.subr.mxu0 %v395
    %431 = vmatpush1.msra.mxu0 %v394
    %432 = vmatprep.subr.mxu0 %v399
    %433 = vmatpush1.msra.mxu0 %v398
    %434 = vmatprep.subr.mxu0 0.0
    %435 = vmatpush1.msra.mxu0 0.0
    %436 = vmatprep.subr.mxu0 0.0
    %437 = vmatpush1.msra.mxu0 0.0
    %438 = vmatprep.subr.mxu0 0.0
    %439 = vmatpush1.msra.mxu0 0.0
    %440 = vmatprep.subr.mxu0 0.0
    %441 = vmatpush1.msra.mxu0 0.0
    %442 = vmatprep.subr.mxu0 0.0
    %443 = vmatpush1.msra.mxu0 0.0
    %444 = vmatprep.subr.mxu0 0.0
    %445 = vmatpush1.msra.mxu0 0.0
    %446 = vmatprep.subr.mxu0 0.0
    %447 = vmatpush1.msra.mxu0 0.0
    %448 = vmatprep.subr.mxu0 0.0
    %449 = vmatpush1.msra.mxu0 0.0
    %450 = vmatprep.subr.mxu0 0.0
    %451 = vmatpush1.msra.mxu0 0.0
    %452 = vmatprep.subr.mxu0 0.0
    %453 = vmatpush1.msra.mxu0 0.0
    %454 = vmatprep.subr.mxu0 0.0
    %455 = vmatpush1.msra.mxu0 0.0
    %456 = vmatprep.subr.mxu0 0.0
    %457 = vmatpush1.msra.mxu0 0.0
    %458 = vmatprep.subr.mxu0 0.0
    %459 = vmatpush1.msra.mxu0 0.0
    %460 = vmatprep.subr.mxu0 0.0
    %461 = vmatpush1.msra.mxu0 0.0
    %462 = vmatprep.subr.mxu0 0.0
    %463 = vmatpush1.msra.mxu0 0.0
    %464 = vmatprep.subr.mxu0 0.0
    %465 = vmatpush1.msra.mxu0 0.0
    %466 = vmatprep.mubr.f32.mxu0 0.0
    %467 = vmatmul.mubr.f32.gmra.mrb[0].mxu0 %v319
    %v468 = vpop.f32.mrb[0].mxu0
    %v469 = vadd.f32 0.0, %v468
    %v470 = vpop.f32.mrb[0].mxu0
    %v471 = vadd.f32 0.0, %v470
    %472 = vmatprep.mubr.f32.mxu0 0.0
    %473 = vmatmul.mubr.f32.gmra.mrb[0].mxu0 %v320
    %v474 = vpop.f32.mrb[0].mxu0
    %v475 = vadd.f32 0.0, %v474
    %v476 = vpop.f32.mrb[0].mxu0
    %v477 = vadd.f32 0.0, %v476
    %478 = vmatprep.mubr.f32.mxu0 0.0
    %479 = vmatmul.mubr.f32.gmra.mrb[0].mxu0 %v321
    %v480 = vpop.f32.mrb[0].mxu0
    %v481 = vadd.f32 0.0, %v480
    %v482 = vpop.f32.mrb[0].mxu0
    %v483 = vadd.f32 0.0, %v482
    %484 = vmatprep.mubr.f32.mxu0 0.0
    %485 = vmatmul.mubr.f32.gmra.mrb[0].mxu0 %v322
    %v486 = vpop.f32.mrb[0].mxu0
    %v487 = vadd.f32 0.0, %v486
    %v488 = vpop.f32.mrb[0].mxu0
    %v489 = vadd.f32 0.0, %v488
    %490 = vmatprep.mubr.f32.mxu0 0.0
    %491 = vmatmul.mubr.f32.gmra.mrb[0].mxu0 %v323
    %v492 = vpop.f32.mrb[0].mxu0
    %v493 = vadd.f32 0.0, %v492
    %v494 = vpop.f32.mrb[0].mxu0
    %v495 = vadd.f32 0.0, %v494
    %496 = vmatprep.mubr.f32.mxu0 0.0
    %497 = vmatmul.mubr.f32.gmra.mrb[0].mxu0 %v324
    %v498 = vpop.f32.mrb[0].mxu0
    %v499 = vadd.f32 0.0, %v498
    %v500 = vpop.f32.mrb[0].mxu0
    %v501 = vadd.f32 0.0, %v500
    %502 = vdwg.mxu0
    %503 = vmatprep.subr.mxu0 %v341
    %504 = vmatpush1.msra.mxu0 %v340
    %505 = vmatprep.subr.mxu0 %v345
    %506 = vmatpush1.msra.mxu0 %v344
    %507 = vmatprep.subr.mxu0 %v349
    %508 = vmatpush1.msra.mxu0 %v348
    %509 = vmatprep.subr.mxu0 %v353
    %510 = vmatpush1.msra.mxu0 %v352
    %511 = vmatprep.subr.mxu0 %v357
    %512 = vmatpush1.msra.mxu0 %v356
    %513 = vmatprep.subr.mxu0 %v361
    %514 = vmatpush1.msra.mxu0 %v360
    %515 = vmatprep.subr.mxu0 %v365
    %516 = vmatpush1.msra.mxu0 %v364
    %517 = vmatprep.subr.mxu0 %v369
    %518 = vmatpush1.msra.mxu0 %v368
    %519 = vmatprep.subr.mxu0 %v373
    %520 = vmatpush1.msra.mxu0 %v372
    %521 = vmatprep.subr.mxu0 %v377
    %522 = vmatpush1.msra.mxu0 %v376
    %523 = vmatprep.subr.mxu0 %v381
    %524 = vmatpush1.msra.mxu0 %v380
    %525 = vmatprep.subr.mxu0 %v385
    %526 = vmatpush1.msra.mxu0 %v384
    %527 = vmatprep.subr.mxu0 %v389
    %528 = vmatpush1.msra.mxu0 %v388
    %529 = vmatprep.subr.mxu0 %v393
    %530 = vmatpush1.msra.mxu0 %v392
    %531 = vmatprep.subr.mxu0 %v397
    %532 = vmatpush1.msra.mxu0 %v396
    %533 = vmatprep.subr.mxu0 %v401
    %534 = vmatpush1.msra.mxu0 %v400
    %535 = vmatprep.subr.mxu0 0.0
    %536 = vmatpush1.msra.mxu0 0.0
    %537 = vmatprep.subr.mxu0 0.0
    %538 = vmatpush1.msra.mxu0 0.0
    %539 = vmatprep.subr.mxu0 0.0
    %540 = vmatpush1.msra.mxu0 0.0
    %541 = vmatprep.subr.mxu0 0.0
    %542 = vmatpush1.msra.mxu0 0.0
    %543 = vmatprep.subr.mxu0 0.0
    %544 = vmatpush1.msra.mxu0 0.0
    %545 = vmatprep.subr.mxu0 0.0
    %546 = vmatpush1.msra.mxu0 0.0
    %547 = vmatprep.subr.mxu0 0.0
    %548 = vmatpush1.msra.mxu0 0.0
    %549 = vmatprep.subr.mxu0 0.0
    %550 = vmatpush1.msra.mxu0 0.0
    %551 = vmatprep.subr.mxu0 0.0
    %552 = vmatpush1.msra.mxu0 0.0
    %553 = vmatprep.subr.mxu0 0.0
    %554 = vmatpush1.msra.mxu0 0.0
    %555 = vmatprep.subr.mxu0 0.0
    %556 = vmatpush1.msra.mxu0 0.0
    %557 = vmatprep.subr.mxu0 0.0
    %558 = vmatpush1.msra.mxu0 0.0
    %559 = vmatprep.subr.mxu0 0.0
    %560 = vmatpush1.msra.mxu0 0.0
    %561 = vmatprep.subr.mxu0 0.0
    %562 = vmatpush1.msra.mxu0 0.0
    %563 = vmatprep.subr.mxu0 0.0
    %564 = vmatpush1.msra.mxu0 0.0
    %565 = vmatprep.subr.mxu0 0.0
    %566 = vmatpush1.msra.mxu0 0.0
    %567 = vmatprep.mubr.f32.mxu0 0.0
    %568 = vmatmul.mubr.f32.gmra.mrb[0].mxu0 %v319
    %v569 = vpop.f32.mrb[0].mxu0
    %v570 = vadd.f32 0.0, %v569
    %v571 = vpop.f32.mrb[0].mxu0
    %v572 = vadd.f32 0.0, %v571
    %573 = vmatprep.mubr.f32.mxu0 0.0
    %574 = vmatmul.mubr.f32.gmra.mrb[0].mxu0 %v320
    %v575 = vpop.f32.mrb[0].mxu0
    %v576 = vadd.f32 0.0, %v575
    %v577 = vpop.f32.mrb[0].mxu0
    %v578 = vadd.f32 0.0, %v577
    %579 = vmatprep.mubr.f32.mxu0 0.0
    %580 = vmatmul.mubr.f32.gmra.mrb[0].mxu0 %v321
    %v581 = vpop.f32.mrb[0].mxu0
    %v582 = vadd.f32 0.0, %v581
    %v583 = vpop.f32.mrb[0].mxu0
    %v584 = vadd.f32 0.0, %v583
    %585 = vmatprep.mubr.f32.mxu0 0.0
    %586 = vmatmul.mubr.f32.gmra.mrb[0].mxu0 %v322
    %v587 = vpop.f32.mrb[0].mxu0
    %v588 = vadd.f32 0.0, %v587
    %v589 = vpop.f32.mrb[0].mxu0
    %v590 = vadd.f32 0.0, %v589
    %591 = vmatprep.mubr.f32.mxu0 0.0
    %592 = vmatmul.mubr.f32.gmra.mrb[0].mxu0 %v323
    %v593 = vpop.f32.mrb[0].mxu0
    %v594 = vadd.f32 0.0, %v593
    %v595 = vpop.f32.mrb[0].mxu0
    %v596 = vadd.f32 0.0, %v595
    %597 = vmatprep.mubr.f32.mxu0 0.0
    %598 = vmatmul.mubr.f32.gmra.mrb[0].mxu0 %v324
    %v599 = vpop.f32.mrb[0].mxu0
    %v600 = vadd.f32 0.0, %v599
    %v601 = vpop.f32.mrb[0].mxu0
    %v602 = vadd.f32 0.0, %v601
    %603 = vdwg.mxu0
    %v605 = vlaneseq
    %v606 = vshrl.u32 %v605, 7
    %v607 = vsub.s32 0, %v606
    %v608 = vrot.slane %v337, %v607
    %v609 = vlaneseq
    %v610 = vshrl.u32 %v609, 7
    %v611 = vsub.s32 1, %v610
    %v612 = vrot.slane %v337, %v611
    %v613 = vlaneseq
    %v614 = vshrl.u32 %v613, 7
    %v615 = vsub.s32 2, %v614
    %v616 = vrot.slane %v337, %v615
    %v617 = vlaneseq
    %v618 = vshrl.u32 %v617, 7
    %v619 = vsub.s32 3, %v618
    %v620 = vrot.slane %v337, %v619
    %v625 = vadd.f32 %v608, %v469
    %v626 = vadd.f32 %v612, %v471
    %v627 = vadd.f32 %v616, %v570
    %v628 = vadd.f32 %v620, %v572
    %v629 = vadd.f32 %v608, %v475
    %v630 = vadd.f32 %v612, %v477
    %v631 = vadd.f32 %v616, %v576
    %v632 = vadd.f32 %v620, %v578
    %v633 = vadd.f32 %v608, %v481
    %v634 = vadd.f32 %v612, %v483
    %v635 = vadd.f32 %v616, %v582
    %v636 = vadd.f32 %v620, %v584
    %v637 = vadd.f32 %v608, %v487
    %v638 = vadd.f32 %v612, %v489
    %v639 = vadd.f32 %v616, %v588
    %v640 = vadd.f32 %v620, %v590
    %v641 = vadd.f32 %v608, %v493
    %v642 = vadd.f32 %v612, %v495
    %v643 = vadd.f32 %v616, %v594
    %v644 = vadd.f32 %v620, %v596
    %v645 = vadd.f32 %v608, %v499
    %v646 = vadd.f32 %v612, %v501
    %v647 = vadd.f32 %v616, %v600
    %v648 = vadd.f32 %v620, %v602
    %649 = vst [vmem:[%s4] sm:$0xff] %v625
    %650 = vst [vmem:[%s4 + $0x8] sm:$0xff] %v626
    %651 = vst [vmem:[%s4 + $0x10] sm:$0xff] %v627
    %652 = vst [vmem:[%s4 + $0x18] sm:$0xff] %v628
    %653 = vst [vmem:[%s4 + $0x20] sm:$0xff] %v629
    %654 = vst [vmem:[%s4 + $0x28] sm:$0xff] %v630
    %655 = vst [vmem:[%s4 + $0x30] sm:$0xff] %v631
    %656 = vst [vmem:[%s4 + $0x38] sm:$0xff] %v632
    %657 = vst [vmem:[%s4 + $0x40] sm:$0xff] %v633
    %658 = vst [vmem:[%s4 + $0x48] sm:$0xff] %v634
    %659 = vst [vmem:[%s4 + $0x50] sm:$0xff] %v635
    %660 = vst [vmem:[%s4 + $0x58] sm:$0xff] %v636
    %661 = vst [vmem:[%s4 + $0x60] sm:$0xff] %v637
    %662 = vst [vmem:[%s4 + $0x68] sm:$0xff] %v638
    %663 = vst [vmem:[%s4 + $0x70] sm:$0xff] %v639
    %664 = vst [vmem:[%s4 + $0x78] sm:$0xff] %v640
    %665 = vst [vmem:[%s4 + $0x80] sm:$0xff] %v641
    %666 = vst [vmem:[%s4 + $0x88] sm:$0xff] %v642
    %667 = vst [vmem:[%s4 + $0x90] sm:$0xff] %v643
    %668 = vst [vmem:[%s4 + $0x98] sm:$0xff] %v644
    %669 = vst [vmem:[%s4 + $0xa0] sm:$0xff] %v645
    %670 = vst [vmem:[%s4 + $0xa8] sm:$0xff] %v646
    %671 = vst [vmem:[%s4 + $0xb0] sm:$0xff] %v647
    %672 = vst [vmem:[%s4 + $0xb8] sm:$0xff] %v648
    %v673 = vld [vmem:[%s4] sm:$0xff]
    %v674 = vld [vmem:[%s4 + $0x8] sm:$0xff]
    %v675 = vld [vmem:[%s4 + $0x10] sm:$0xff]
    %v676 = vld [vmem:[%s4 + $0x18] sm:$0xff]
    %v677 = vld [vmem:[%s4 + $0x20] sm:$0xff]
    %v678 = vld [vmem:[%s4 + $0x28] sm:$0xff]
    %v679 = vld [vmem:[%s4 + $0x30] sm:$0xff]
    %v680 = vld [vmem:[%s4 + $0x38] sm:$0xff]
    %v681 = vld [vmem:[%s4 + $0x40] sm:$0xff]
    %v682 = vld [vmem:[%s4 + $0x48] sm:$0xff]
    %v683 = vld [vmem:[%s4 + $0x50] sm:$0xff]
    %v684 = vld [vmem:[%s4 + $0x58] sm:$0xff]
    %v685 = vld [vmem:[%s4 + $0x60] sm:$0xff]
    %v686 = vld [vmem:[%s4 + $0x68] sm:$0xff]
    %v687 = vld [vmem:[%s4 + $0x70] sm:$0xff]
    %v688 = vld [vmem:[%s4 + $0x78] sm:$0xff]
    %v689 = vld [vmem:[%s4 + $0x80] sm:$0xff]
    %v690 = vld [vmem:[%s4 + $0x88] sm:$0xff]
    %v691 = vld [vmem:[%s4 + $0x90] sm:$0xff]
    %v692 = vld [vmem:[%s4 + $0x98] sm:$0xff]
    %v693 = vld [vmem:[%s4 + $0xa0] sm:$0xff]
    %v694 = vld [vmem:[%s4 + $0xa8] sm:$0xff]
    %v695 = vld [vmem:[%s4 + $0xb0] sm:$0xff]
    %v696 = vld [vmem:[%s4 + $0xb8] sm:$0xff]
    %s697 = scalar_lea.vmem [#allocation2], 512
    %v698 = vld [vmem:[%s697] sm:$0xff]
    %v699 = vld [vmem:[%s697 + $0x8] sm:$0xff]
    %v700 = vld [vmem:[%s697 + $0x10] sm:$0xff]
    %v701 = vld [vmem:[%s697 + $0x18] sm:$0xff]
    %v702 = vld [vmem:[%s697 + $0x20] sm:$0xff]
    %v703 = vld [vmem:[%s697 + $0x28] sm:$0xff]
    %v704 = vld [vmem:[%s697 + $0x30] sm:$0xff]
    %v705 = vld [vmem:[%s697 + $0x38] sm:$0xff]
    %v706 = vld [vmem:[%s697 + $0x40] sm:$0xff]
    %v707 = vld [vmem:[%s697 + $0x48] sm:$0xff]
    %v708 = vld [vmem:[%s697 + $0x50] sm:$0xff]
    %v709 = vld [vmem:[%s697 + $0x58] sm:$0xff]
    %v710 = vld [vmem:[%s697 + $0x60] sm:$0xff]
    %v711 = vld [vmem:[%s697 + $0x68] sm:$0xff]
    %v712 = vld [vmem:[%s697 + $0x70] sm:$0xff]
    %v713 = vld [vmem:[%s697 + $0x78] sm:$0xff]
    %v714 = vld [vmem:[%s697 + $0x80] sm:$0xff]
    %v715 = vld [vmem:[%s697 + $0x88] sm:$0xff]
    %v716 = vld [vmem:[%s697 + $0x90] sm:$0xff]
    %v717 = vld [vmem:[%s697 + $0x98] sm:$0xff]
    %v718 = vld [vmem:[%s697 + $0xa0] sm:$0xff]
    %v719 = vld [vmem:[%s697 + $0xa8] sm:$0xff]
    %v720 = vld [vmem:[%s697 + $0xb0] sm:$0xff]
    %v721 = vld [vmem:[%s697 + $0xb8] sm:$0xff]
    %v722 = vld [vmem:[%s697 + $0xc0] sm:$0xff]
    %v723 = vld [vmem:[%s697 + $0xc8] sm:$0xff]
    %v724 = vld [vmem:[%s697 + $0xd0] sm:$0xff]
    %v725 = vld [vmem:[%s697 + $0xd8] sm:$0xff]
    %v726 = vld [vmem:[%s697 + $0xe0] sm:$0xff]
    %v727 = vld [vmem:[%s697 + $0xe8] sm:$0xff]
    %v728 = vld [vmem:[%s697 + $0xf0] sm:$0xff]
    %v729 = vld [vmem:[%s697 + $0xf8] sm:$0xff]
    %v730 = vld [vmem:[%s697 + $0x100] sm:$0xff]
    %v731 = vld [vmem:[%s697 + $0x108] sm:$0xff]
    %v732 = vld [vmem:[%s697 + $0x110] sm:$0xff]
    %v733 = vld [vmem:[%s697 + $0x118] sm:$0xff]
    %v734 = vld [vmem:[%s697 + $0x120] sm:$0xff]
    %v735 = vld [vmem:[%s697 + $0x128] sm:$0xff]
    %v736 = vld [vmem:[%s697 + $0x130] sm:$0xff]
    %v737 = vld [vmem:[%s697 + $0x138] sm:$0xff]
    %v738 = vld [vmem:[%s697 + $0x140] sm:$0xff]
    %v739 = vld [vmem:[%s697 + $0x148] sm:$0xff]
    %v740 = vld [vmem:[%s697 + $0x150] sm:$0xff]
    %v741 = vld [vmem:[%s697 + $0x158] sm:$0xff]
    %v742 = vld [vmem:[%s697 + $0x160] sm:$0xff]
    %v743 = vld [vmem:[%s697 + $0x168] sm:$0xff]
    %v744 = vld [vmem:[%s697 + $0x170] sm:$0xff]
    %v745 = vld [vmem:[%s697 + $0x178] sm:$0xff]
    %v746 = vld [vmem:[%s697 + $0x180] sm:$0xff]
    %v747 = vld [vmem:[%s697 + $0x188] sm:$0xff]
    %v748 = vld [vmem:[%s697 + $0x190] sm:$0xff]
    %v749 = vld [vmem:[%s697 + $0x198] sm:$0xff]
    %v750 = vld [vmem:[%s697 + $0x1a0] sm:$0xff]
    %v751 = vld [vmem:[%s697 + $0x1a8] sm:$0xff]
    %v752 = vld [vmem:[%s697 + $0x1b0] sm:$0xff]
    %v753 = vld [vmem:[%s697 + $0x1b8] sm:$0xff]
    %v754 = vld [vmem:[%s697 + $0x1c0] sm:$0xff]
    %v755 = vld [vmem:[%s697 + $0x1c8] sm:$0xff]
    %v756 = vld [vmem:[%s697 + $0x1d0] sm:$0xff]
    %v757 = vld [vmem:[%s697 + $0x1d8] sm:$0xff]
    %v758 = vld [vmem:[%s697 + $0x1e0] sm:$0xff]
    %v759 = vld [vmem:[%s697 + $0x1e8] sm:$0xff]
    %v760 = vld [vmem:[%s697 + $0x1f0] sm:$0xff]
    %v761 = vld [vmem:[%s697 + $0x1f8] sm:$0xff]
    %762 = vmatprep.subr.mxu0 %v699
    %763 = vmatpush1.msra.mxu0 %v698
    %764 = vmatprep.subr.mxu0 %v703
    %765 = vmatpush1.msra.mxu0 %v702
    %766 = vmatprep.subr.mxu0 %v707
    %767 = vmatpush1.msra.mxu0 %v706
    %768 = vmatprep.subr.mxu0 %v711
    %769 = vmatpush1.msra.mxu0 %v710
    %770 = vmatprep.subr.mxu0 %v715
    %771 = vmatpush1.msra.mxu0 %v714
    %772 = vmatprep.subr.mxu0 %v719
    %773 = vmatpush1.msra.mxu0 %v718
    %774 = vmatprep.subr.mxu0 %v723
    %775 = vmatpush1.msra.mxu0 %v722
    %776 = vmatprep.subr.mxu0 %v727
    %777 = vmatpush1.msra.mxu0 %v726
    %778 = vmatprep.subr.mxu0 %v731
    %779 = vmatpush1.msra.mxu0 %v730
    %780 = vmatprep.subr.mxu0 %v735
    %781 = vmatpush1.msra.mxu0 %v734
    %782 = vmatprep.subr.mxu0 %v739
    %783 = vmatpush1.msra.mxu0 %v738
    %784 = vmatprep.subr.mxu0 %v743
    %785 = vmatpush1.msra.mxu0 %v742
    %786 = vmatprep.subr.mxu0 %v747
    %787 = vmatpush1.msra.mxu0 %v746
    %788 = vmatprep.subr.mxu0 %v751
    %789 = vmatpush1.msra.mxu0 %v750
    %790 = vmatprep.subr.mxu0 %v755
    %791 = vmatpush1.msra.mxu0 %v754
    %792 = vmatprep.subr.mxu0 %v759
    %793 = vmatpush1.msra.mxu0 %v758
    %794 = vmatprep.subr.mxu0 0.0
    %795 = vmatpush1.msra.mxu0 0.0
    %796 = vmatprep.subr.mxu0 0.0
    %797 = vmatpush1.msra.mxu0 0.0
    %798 = vmatprep.subr.mxu0 0.0
    %799 = vmatpush1.msra.mxu0 0.0
    %800 = vmatprep.subr.mxu0 0.0
    %801 = vmatpush1.msra.mxu0 0.0
    %802 = vmatprep.subr.mxu0 0.0
    %803 = vmatpush1.msra.mxu0 0.0
    %804 = vmatprep.subr.mxu0 0.0
    %805 = vmatpush1.msra.mxu0 0.0
    %806 = vmatprep.subr.mxu0 0.0
    %807 = vmatpush1.msra.mxu0 0.0
    %808 = vmatprep.subr.mxu0 0.0
    %809 = vmatpush1.msra.mxu0 0.0
    %810 = vmatprep.subr.mxu0 0.0
    %811 = vmatpush1.msra.mxu0 0.0
    %812 = vmatprep.subr.mxu0 0.0
    %813 = vmatpush1.msra.mxu0 0.0
    %814 = vmatprep.subr.mxu0 0.0
    %815 = vmatpush1.msra.mxu0 0.0
    %816 = vmatprep.subr.mxu0 0.0
    %817 = vmatpush1.msra.mxu0 0.0
    %818 = vmatprep.subr.mxu0 0.0
    %819 = vmatpush1.msra.mxu0 0.0
    %820 = vmatprep.subr.mxu0 0.0
    %821 = vmatpush1.msra.mxu0 0.0
    %822 = vmatprep.subr.mxu0 0.0
    %823 = vmatpush1.msra.mxu0 0.0
    %824 = vmatprep.subr.mxu0 0.0
    %825 = vmatpush1.msra.mxu0 0.0
    %826 = vmatprep.mubr.f32.mxu0 0.0
    %827 = vmatmul.mubr.f32.gmra.mrb[0].mxu0 %v325
    %v828 = vpop.f32.mrb[0].mxu0
    %v829 = vadd.f32 0.0, %v828
    %v830 = vpop.f32.mrb[0].mxu0
    %v831 = vadd.f32 0.0, %v830
    %832 = vmatprep.mubr.f32.mxu0 0.0
    %833 = vmatmul.mubr.f32.gmra.mrb[0].mxu0 %v326
    %v834 = vpop.f32.mrb[0].mxu0
    %v835 = vadd.f32 0.0, %v834
    %v836 = vpop.f32.mrb[0].mxu0
    %v837 = vadd.f32 0.0, %v836
    %838 = vmatprep.mubr.f32.mxu0 0.0
    %839 = vmatmul.mubr.f32.gmra.mrb[0].mxu0 %v327
    %v840 = vpop.f32.mrb[0].mxu0
    %v841 = vadd.f32 0.0, %v840
    %v842 = vpop.f32.mrb[0].mxu0
    %v843 = vadd.f32 0.0, %v842
    %844 = vmatprep.mubr.f32.mxu0 0.0
    %845 = vmatmul.mubr.f32.gmra.mrb[0].mxu0 %v328
    %v846 = vpop.f32.mrb[0].mxu0
    %v847 = vadd.f32 0.0, %v846
    %v848 = vpop.f32.mrb[0].mxu0
    %v849 = vadd.f32 0.0, %v848
    %850 = vmatprep.mubr.f32.mxu0 0.0
    %851 = vmatmul.mubr.f32.gmra.mrb[0].mxu0 %v329
    %v852 = vpop.f32.mrb[0].mxu0
    %v853 = vadd.f32 0.0, %v852
    %v854 = vpop.f32.mrb[0].mxu0
    %v855 = vadd.f32 0.0, %v854
    %856 = vmatprep.mubr.f32.mxu0 0.0
    %857 = vmatmul.mubr.f32.gmra.mrb[0].mxu0 %v330
    %v858 = vpop.f32.mrb[0].mxu0
    %v859 = vadd.f32 0.0, %v858
    %v860 = vpop.f32.mrb[0].mxu0
    %v861 = vadd.f32 0.0, %v860
    %862 = vdwg.mxu0
    %863 = vmatprep.subr.mxu0 %v701
    %864 = vmatpush1.msra.mxu0 %v700
    %865 = vmatprep.subr.mxu0 %v705
    %866 = vmatpush1.msra.mxu0 %v704
    %867 = vmatprep.subr.mxu0 %v709
    %868 = vmatpush1.msra.mxu0 %v708
    %869 = vmatprep.subr.mxu0 %v713
    %870 = vmatpush1.msra.mxu0 %v712
    %871 = vmatprep.subr.mxu0 %v717
    %872 = vmatpush1.msra.mxu0 %v716
    %873 = vmatprep.subr.mxu0 %v721
    %874 = vmatpush1.msra.mxu0 %v720
    %875 = vmatprep.subr.mxu0 %v725
    %876 = vmatpush1.msra.mxu0 %v724
    %877 = vmatprep.subr.mxu0 %v729
    %878 = vmatpush1.msra.mxu0 %v728
    %879 = vmatprep.subr.mxu0 %v733
    %880 = vmatpush1.msra.mxu0 %v732
    %881 = vmatprep.subr.mxu0 %v737
    %882 = vmatpush1.msra.mxu0 %v736
    %883 = vmatprep.subr.mxu0 %v741
    %884 = vmatpush1.msra.mxu0 %v740
    %885 = vmatprep.subr.mxu0 %v745
    %886 = vmatpush1.msra.mxu0 %v744
    %887 = vmatprep.subr.mxu0 %v749
    %888 = vmatpush1.msra.mxu0 %v748
    %889 = vmatprep.subr.mxu0 %v753
    %890 = vmatpush1.msra.mxu0 %v752
    %891 = vmatprep.subr.mxu0 %v757
    %892 = vmatpush1.msra.mxu0 %v756
    %893 = vmatprep.subr.mxu0 %v761
    %894 = vmatpush1.msra.mxu0 %v760
    %895 = vmatprep.subr.mxu0 0.0
    %896 = vmatpush1.msra.mxu0 0.0
    %897 = vmatprep.subr.mxu0 0.0
    %898 = vmatpush1.msra.mxu0 0.0
    %899 = vmatprep.subr.mxu0 0.0
    %900 = vmatpush1.msra.mxu0 0.0
    %901 = vmatprep.subr.mxu0 0.0
    %902 = vmatpush1.msra.mxu0 0.0
    %903 = vmatprep.subr.mxu0 0.0
    %904 = vmatpush1.msra.mxu0 0.0
    %905 = vmatprep.subr.mxu0 0.0
    %906 = vmatpush1.msra.mxu0 0.0
    %907 = vmatprep.subr.mxu0 0.0
    %908 = vmatpush1.msra.mxu0 0.0
    %909 = vmatprep.subr.mxu0 0.0
    %910 = vmatpush1.msra.mxu0 0.0
    %911 = vmatprep.subr.mxu0 0.0
    %912 = vmatpush1.msra.mxu0 0.0
    %913 = vmatprep.subr.mxu0 0.0
    %914 = vmatpush1.msra.mxu0 0.0
    %915 = vmatprep.subr.mxu0 0.0
    %916 = vmatpush1.msra.mxu0 0.0
    %917 = vmatprep.subr.mxu0 0.0
    %918 = vmatpush1.msra.mxu0 0.0
    %919 = vmatprep.subr.mxu0 0.0
    %920 = vmatpush1.msra.mxu0 0.0
    %921 = vmatprep.subr.mxu0 0.0
    %922 = vmatpush1.msra.mxu0 0.0
    %923 = vmatprep.subr.mxu0 0.0
    %924 = vmatpush1.msra.mxu0 0.0
    %925 = vmatprep.subr.mxu0 0.0
    %926 = vmatpush1.msra.mxu0 0.0
    %927 = vmatprep.mubr.f32.mxu0 0.0
    %928 = vmatmul.mubr.f32.gmra.mrb[0].mxu0 %v325
    %v929 = vpop.f32.mrb[0].mxu0
    %v930 = vadd.f32 0.0, %v929
    %v931 = vpop.f32.mrb[0].mxu0
    %v932 = vadd.f32 0.0, %v931
    %933 = vmatprep.mubr.f32.mxu0 0.0
    %934 = vmatmul.mubr.f32.gmra.mrb[0].mxu0 %v326
    %v935 = vpop.f32.mrb[0].mxu0
    %v936 = vadd.f32 0.0, %v935
    %v937 = vpop.f32.mrb[0].mxu0
    %v938 = vadd.f32 0.0, %v937
    %939 = vmatprep.mubr.f32.mxu0 0.0
    %940 = vmatmul.mubr.f32.gmra.mrb[0].mxu0 %v327
    %v941 = vpop.f32.mrb[0].mxu0
    %v942 = vadd.f32 0.0, %v941
    %v943 = vpop.f32.mrb[0].mxu0
    %v944 = vadd.f32 0.0, %v943
    %945 = vmatprep.mubr.f32.mxu0 0.0
    %946 = vmatmul.mubr.f32.gmra.mrb[0].mxu0 %v328
    %v947 = vpop.f32.mrb[0].mxu0
    %v948 = vadd.f32 0.0, %v947
    %v949 = vpop.f32.mrb[0].mxu0
    %v950 = vadd.f32 0.0, %v949
    %951 = vmatprep.mubr.f32.mxu0 0.0
    %952 = vmatmul.mubr.f32.gmra.mrb[0].mxu0 %v329
    %v953 = vpop.f32.mrb[0].mxu0
    %v954 = vadd.f32 0.0, %v953
    %v955 = vpop.f32.mrb[0].mxu0
    %v956 = vadd.f32 0.0, %v955
    %957 = vmatprep.mubr.f32.mxu0 0.0
    %958 = vmatmul.mubr.f32.gmra.mrb[0].mxu0 %v330
    %v959 = vpop.f32.mrb[0].mxu0
    %v960 = vadd.f32 0.0, %v959
    %v961 = vpop.f32.mrb[0].mxu0
    %v962 = vadd.f32 0.0, %v961
    %963 = vdwg.mxu0
    %v964 = vadd.f32 %v673, %v829
    %v965 = vadd.f32 %v674, %v831
    %v966 = vadd.f32 %v675, %v930
    %v967 = vadd.f32 %v676, %v932
    %v968 = vadd.f32 %v677, %v835
    %v969 = vadd.f32 %v678, %v837
    %v970 = vadd.f32 %v679, %v936
    %v971 = vadd.f32 %v680, %v938
    %v972 = vadd.f32 %v681, %v841
    %v973 = vadd.f32 %v682, %v843
    %v974 = vadd.f32 %v683, %v942
    %v975 = vadd.f32 %v684, %v944
    %v976 = vadd.f32 %v685, %v847
    %v977 = vadd.f32 %v686, %v849
    %v978 = vadd.f32 %v687, %v948
    %v979 = vadd.f32 %v688, %v950
    %v980 = vadd.f32 %v689, %v853
    %v981 = vadd.f32 %v690, %v855
    %v982 = vadd.f32 %v691, %v954
    %v983 = vadd.f32 %v692, %v956
    %v984 = vadd.f32 %v693, %v859
    %v985 = vadd.f32 %v694, %v861
    %v986 = vadd.f32 %v695, %v960
    %v987 = vadd.f32 %v696, %v962
    %988 = vst [vmem:[%s4] sm:$0xff] %v964
    %989 = vst [vmem:[%s4 + $0x8] sm:$0xff] %v965
    %990 = vst [vmem:[%s4 + $0x10] sm:$0xff] %v966
    %991 = vst [vmem:[%s4 + $0x18] sm:$0xff] %v967
    %992 = vst [vmem:[%s4 + $0x20] sm:$0xff] %v968
    %993 = vst [vmem:[%s4 + $0x28] sm:$0xff] %v969
    %994 = vst [vmem:[%s4 + $0x30] sm:$0xff] %v970
    %995 = vst [vmem:[%s4 + $0x38] sm:$0xff] %v971
    %996 = vst [vmem:[%s4 + $0x40] sm:$0xff] %v972
    %997 = vst [vmem:[%s4 + $0x48] sm:$0xff] %v973
    %998 = vst [vmem:[%s4 + $0x50] sm:$0xff] %v974
    %999 = vst [vmem:[%s4 + $0x58] sm:$0xff] %v975
    %1000 = vst [vmem:[%s4 + $0x60] sm:$0xff] %v976
    %1001 = vst [vmem:[%s4 + $0x68] sm:$0xff] %v977
    %1002 = vst [vmem:[%s4 + $0x70] sm:$0xff] %v978
    %1003 = vst [vmem:[%s4 + $0x78] sm:$0xff] %v979
    %1004 = vst [vmem:[%s4 + $0x80] sm:$0xff] %v980
    %1005 = vst [vmem:[%s4 + $0x88] sm:$0xff] %v981
    %1006 = vst [vmem:[%s4 + $0x90] sm:$0xff] %v982
    %1007 = vst [vmem:[%s4 + $0x98] sm:$0xff] %v983
    %1008 = vst [vmem:[%s4 + $0xa0] sm:$0xff] %v984
    %1009 = vst [vmem:[%s4 + $0xa8] sm:$0xff] %v985
    %1010 = vst [vmem:[%s4 + $0xb0] sm:$0xff] %v986
    %1011 = vst [vmem:[%s4 + $0xb8] sm:$0xff] %v987
    %v1012 = vld [vmem:[%s4] sm:$0xff]
    %v1013 = vld [vmem:[%s4 + $0x8] sm:$0xff]
    %v1014 = vld [vmem:[%s4 + $0x10] sm:$0xff]
    %v1015 = vld [vmem:[%s4 + $0x18] sm:$0xff]
    %v1016 = vld [vmem:[%s4 + $0x20] sm:$0xff]
    %v1017 = vld [vmem:[%s4 + $0x28] sm:$0xff]
    %v1018 = vld [vmem:[%s4 + $0x30] sm:$0xff]
    %v1019 = vld [vmem:[%s4 + $0x38] sm:$0xff]
    %v1020 = vld [vmem:[%s4 + $0x40] sm:$0xff]
    %v1021 = vld [vmem:[%s4 + $0x48] sm:$0xff]
    %v1022 = vld [vmem:[%s4 + $0x50] sm:$0xff]
    %v1023 = vld [vmem:[%s4 + $0x58] sm:$0xff]
    %v1024 = vld [vmem:[%s4 + $0x60] sm:$0xff]
    %v1025 = vld [vmem:[%s4 + $0x68] sm:$0xff]
    %v1026 = vld [vmem:[%s4 + $0x70] sm:$0xff]
    %v1027 = vld [vmem:[%s4 + $0x78] sm:$0xff]
    %v1028 = vld [vmem:[%s4 + $0x80] sm:$0xff]
    %v1029 = vld [vmem:[%s4 + $0x88] sm:$0xff]
    %v1030 = vld [vmem:[%s4 + $0x90] sm:$0xff]
    %v1031 = vld [vmem:[%s4 + $0x98] sm:$0xff]
    %v1032 = vld [vmem:[%s4 + $0xa0] sm:$0xff]
    %v1033 = vld [vmem:[%s4 + $0xa8] sm:$0xff]
    %v1034 = vld [vmem:[%s4 + $0xb0] sm:$0xff]
    %v1035 = vld [vmem:[%s4 + $0xb8] sm:$0xff]
    %s1036 = scalar_lea.vmem [#allocation2], 1024
    %v1037 = vld [vmem:[%s1036] sm:$0xff]
    %v1038 = vld [vmem:[%s1036 + $0x8] sm:$0xff]
    %v1039 = vld [vmem:[%s1036 + $0x10] sm:$0xff]
    %v1040 = vld [vmem:[%s1036 + $0x18] sm:$0xff]
    %v1041 = vld [vmem:[%s1036 + $0x20] sm:$0xff]
    %v1042 = vld [vmem:[%s1036 + $0x28] sm:$0xff]
    %v1043 = vld [vmem:[%s1036 + $0x30] sm:$0xff]
    %v1044 = vld [vmem:[%s1036 + $0x38] sm:$0xff]
    %v1045 = vld [vmem:[%s1036 + $0x40] sm:$0xff]
    %v1046 = vld [vmem:[%s1036 + $0x48] sm:$0xff]
    %v1047 = vld [vmem:[%s1036 + $0x50] sm:$0xff]
    %v1048 = vld [vmem:[%s1036 + $0x58] sm:$0xff]
    %v1049 = vld [vmem:[%s1036 + $0x60] sm:$0xff]
    %v1050 = vld [vmem:[%s1036 + $0x68] sm:$0xff]
    %v1051 = vld [vmem:[%s1036 + $0x70] sm:$0xff]
    %v1052 = vld [vmem:[%s1036 + $0x78] sm:$0xff]
    %v1053 = vld [vmem:[%s1036 + $0x80] sm:$0xff]
    %v1054 = vld [vmem:[%s1036 + $0x88] sm:$0xff]
    %v1055 = vld [vmem:[%s1036 + $0x90] sm:$0xff]
    %v1056 = vld [vmem:[%s1036 + $0x98] sm:$0xff]
    %v1057 = vld [vmem:[%s1036 + $0xa0] sm:$0xff]
    %v1058 = vld [vmem:[%s1036 + $0xa8] sm:$0xff]
    %v1059 = vld [vmem:[%s1036 + $0xb0] sm:$0xff]
    %v1060 = vld [vmem:[%s1036 + $0xb8] sm:$0xff]
    %v1061 = vld [vmem:[%s1036 + $0xc0] sm:$0xff]
    %v1062 = vld [vmem:[%s1036 + $0xc8] sm:$0xff]
    %v1063 = vld [vmem:[%s1036 + $0xd0] sm:$0xff]
    %v1064 = vld [vmem:[%s1036 + $0xd8] sm:$0xff]
    %v1065 = vld [vmem:[%s1036 + $0xe0] sm:$0xff]
    %v1066 = vld [vmem:[%s1036 + $0xe8] sm:$0xff]
    %v1067 = vld [vmem:[%s1036 + $0xf0] sm:$0xff]
    %v1068 = vld [vmem:[%s1036 + $0xf8] sm:$0xff]
    %v1069 = vld [vmem:[%s1036 + $0x100] sm:$0xff]
    %v1070 = vld [vmem:[%s1036 + $0x108] sm:$0xff]
    %v1071 = vld [vmem:[%s1036 + $0x110] sm:$0xff]
    %v1072 = vld [vmem:[%s1036 + $0x118] sm:$0xff]
    %v1073 = vld [vmem:[%s1036 + $0x120] sm:$0xff]
    %v1074 = vld [vmem:[%s1036 + $0x128] sm:$0xff]
    %v1075 = vld [vmem:[%s1036 + $0x130] sm:$0xff]
    %v1076 = vld [vmem:[%s1036 + $0x138] sm:$0xff]
    %v1077 = vld [vmem:[%s1036 + $0x140] sm:$0xff]
    %v1078 = vld [vmem:[%s1036 + $0x148] sm:$0xff]
    %v1079 = vld [vmem:[%s1036 + $0x150] sm:$0xff]
    %v1080 = vld [vmem:[%s1036 + $0x158] sm:$0xff]
    %v1081 = vld [vmem:[%s1036 + $0x160] sm:$0xff]
    %v1082 = vld [vmem:[%s1036 + $0x168] sm:$0xff]
    %v1083 = vld [vmem:[%s1036 + $0x170] sm:$0xff]
    %v1084 = vld [vmem:[%s1036 + $0x178] sm:$0xff]
    %v1085 = vld [vmem:[%s1036 + $0x180] sm:$0xff]
    %v1086 = vld [vmem:[%s1036 + $0x188] sm:$0xff]
    %v1087 = vld [vmem:[%s1036 + $0x190] sm:$0xff]
    %v1088 = vld [vmem:[%s1036 + $0x198] sm:$0xff]
    %v1089 = vld [vmem:[%s1036 + $0x1a0] sm:$0xff]
    %v1090 = vld [vmem:[%s1036 + $0x1a8] sm:$0xff]
    %v1091 = vld [vmem:[%s1036 + $0x1b0] sm:$0xff]
    %v1092 = vld [vmem:[%s1036 + $0x1b8] sm:$0xff]
    %v1093 = vld [vmem:[%s1036 + $0x1c0] sm:$0xff]
    %v1094 = vld [vmem:[%s1036 + $0x1c8] sm:$0xff]
    %v1095 = vld [vmem:[%s1036 + $0x1d0] sm:$0xff]
    %v1096 = vld [vmem:[%s1036 + $0x1d8] sm:$0xff]
    %v1097 = vld [vmem:[%s1036 + $0x1e0] sm:$0xff]
    %v1098 = vld [vmem:[%s1036 + $0x1e8] sm:$0xff]
    %v1099 = vld [vmem:[%s1036 + $0x1f0] sm:$0xff]
    %v1100 = vld [vmem:[%s1036 + $0x1f8] sm:$0xff]
    %1101 = vmatprep.subr.mxu0 %v1038
    %1102 = vmatpush1.msra.mxu0 %v1037
    %1103 = vmatprep.subr.mxu0 %v1042
    %1104 = vmatpush1.msra.mxu0 %v1041
    %1105 = vmatprep.subr.mxu0 %v1046
    %1106 = vmatpush1.msra.mxu0 %v1045
    %1107 = vmatprep.subr.mxu0 %v1050
    %1108 = vmatpush1.msra.mxu0 %v1049
    %1109 = vmatprep.subr.mxu0 %v1054
    %1110 = vmatpush1.msra.mxu0 %v1053
    %1111 = vmatprep.subr.mxu0 %v1058
    %1112 = vmatpush1.msra.mxu0 %v1057
    %1113 = vmatprep.subr.mxu0 %v1062
    %1114 = vmatpush1.msra.mxu0 %v1061
    %1115 = vmatprep.subr.mxu0 %v1066
    %1116 = vmatpush1.msra.mxu0 %v1065
    %1117 = vmatprep.subr.mxu0 %v1070
    %1118 = vmatpush1.msra.mxu0 %v1069
    %1119 = vmatprep.subr.mxu0 %v1074
    %1120 = vmatpush1.msra.mxu0 %v1073
    %1121 = vmatprep.subr.mxu0 %v1078
    %1122 = vmatpush1.msra.mxu0 %v1077
    %1123 = vmatprep.subr.mxu0 %v1082
    %1124 = vmatpush1.msra.mxu0 %v1081
    %1125 = vmatprep.subr.mxu0 %v1086
    %1126 = vmatpush1.msra.mxu0 %v1085
    %1127 = vmatprep.subr.mxu0 %v1090
    %1128 = vmatpush1.msra.mxu0 %v1089
    %1129 = vmatprep.subr.mxu0 %v1094
    %1130 = vmatpush1.msra.mxu0 %v1093
    %1131 = vmatprep.subr.mxu0 %v1098
    %1132 = vmatpush1.msra.mxu0 %v1097
    %1133 = vmatprep.subr.mxu0 0.0
    %1134 = vmatpush1.msra.mxu0 0.0
    %1135 = vmatprep.subr.mxu0 0.0
    %1136 = vmatpush1.msra.mxu0 0.0
    %1137 = vmatprep.subr.mxu0 0.0
    %1138 = vmatpush1.msra.mxu0 0.0
    %1139 = vmatprep.subr.mxu0 0.0
    %1140 = vmatpush1.msra.mxu0 0.0
    %1141 = vmatprep.subr.mxu0 0.0
    %1142 = vmatpush1.msra.mxu0 0.0
    %1143 = vmatprep.subr.mxu0 0.0
    %1144 = vmatpush1.msra.mxu0 0.0
    %1145 = vmatprep.subr.mxu0 0.0
    %1146 = vmatpush1.msra.mxu0 0.0
    %1147 = vmatprep.subr.mxu0 0.0
    %1148 = vmatpush1.msra.mxu0 0.0
    %1149 = vmatprep.subr.mxu0 0.0
    %1150 = vmatpush1.msra.mxu0 0.0
    %1151 = vmatprep.subr.mxu0 0.0
    %1152 = vmatpush1.msra.mxu0 0.0
    %1153 = vmatprep.subr.mxu0 0.0
    %1154 = vmatpush1.msra.mxu0 0.0
    %1155 = vmatprep.subr.mxu0 0.0
    %1156 = vmatpush1.msra.mxu0 0.0
    %1157 = vmatprep.subr.mxu0 0.0
    %1158 = vmatpush1.msra.mxu0 0.0
    %1159 = vmatprep.subr.mxu0 0.0
    %1160 = vmatpush1.msra.mxu0 0.0
    %1161 = vmatprep.subr.mxu0 0.0
    %1162 = vmatpush1.msra.mxu0 0.0
    %1163 = vmatprep.subr.mxu0 0.0
    %1164 = vmatpush1.msra.mxu0 0.0
    %1165 = vmatprep.mubr.f32.mxu0 0.0
    %1166 = vmatmul.mubr.f32.gmra.mrb[0].mxu0 %v331
    %v1167 = vpop.f32.mrb[0].mxu0
    %v1168 = vadd.f32 0.0, %v1167
    %v1169 = vpop.f32.mrb[0].mxu0
    %v1170 = vadd.f32 0.0, %v1169
    %1171 = vmatprep.mubr.f32.mxu0 0.0
    %1172 = vmatmul.mubr.f32.gmra.mrb[0].mxu0 %v332
    %v1173 = vpop.f32.mrb[0].mxu0
    %v1174 = vadd.f32 0.0, %v1173
    %v1175 = vpop.f32.mrb[0].mxu0
    %v1176 = vadd.f32 0.0, %v1175
    %1177 = vmatprep.mubr.f32.mxu0 0.0
    %1178 = vmatmul.mubr.f32.gmra.mrb[0].mxu0 %v333
    %v1179 = vpop.f32.mrb[0].mxu0
    %v1180 = vadd.f32 0.0, %v1179
    %v1181 = vpop.f32.mrb[0].mxu0
    %v1182 = vadd.f32 0.0, %v1181
    %1183 = vmatprep.mubr.f32.mxu0 0.0
    %1184 = vmatmul.mubr.f32.gmra.mrb[0].mxu0 %v334
    %v1185 = vpop.f32.mrb[0].mxu0
    %v1186 = vadd.f32 0.0, %v1185
    %v1187 = vpop.f32.mrb[0].mxu0
    %v1188 = vadd.f32 0.0, %v1187
    %1189 = vmatprep.mubr.f32.mxu0 0.0
    %1190 = vmatmul.mubr.f32.gmra.mrb[0].mxu0 %v335
    %v1191 = vpop.f32.mrb[0].mxu0
    %v1192 = vadd.f32 0.0, %v1191
    %v1193 = vpop.f32.mrb[0].mxu0
    %v1194 = vadd.f32 0.0, %v1193
    %1195 = vmatprep.mubr.f32.mxu0 0.0
    %1196 = vmatmul.mubr.f32.gmra.mrb[0].mxu0 %v336
    %v1197 = vpop.f32.mrb[0].mxu0
    %v1198 = vadd.f32 0.0, %v1197
    %v1199 = vpop.f32.mrb[0].mxu0
    %v1200 = vadd.f32 0.0, %v1199
    %1201 = vdwg.mxu0
    %1202 = vmatprep.subr.mxu0 %v1040
    %1203 = vmatpush1.msra.mxu0 %v1039
    %1204 = vmatprep.subr.mxu0 %v1044
    %1205 = vmatpush1.msra.mxu0 %v1043
    %1206 = vmatprep.subr.mxu0 %v1048
    %1207 = vmatpush1.msra.mxu0 %v1047
    %1208 = vmatprep.subr.mxu0 %v1052
    %1209 = vmatpush1.msra.mxu0 %v1051
    %1210 = vmatprep.subr.mxu0 %v1056
    %1211 = vmatpush1.msra.mxu0 %v1055
    %1212 = vmatprep.subr.mxu0 %v1060
    %1213 = vmatpush1.msra.mxu0 %v1059
    %1214 = vmatprep.subr.mxu0 %v1064
    %1215 = vmatpush1.msra.mxu0 %v1063
    %1216 = vmatprep.subr.mxu0 %v1068
    %1217 = vmatpush1.msra.mxu0 %v1067
    %1218 = vmatprep.subr.mxu0 %v1072
    %1219 = vmatpush1.msra.mxu0 %v1071
    %1220 = vmatprep.subr.mxu0 %v1076
    %1221 = vmatpush1.msra.mxu0 %v1075
    %1222 = vmatprep.subr.mxu0 %v1080
    %1223 = vmatpush1.msra.mxu0 %v1079
    %1224 = vmatprep.subr.mxu0 %v1084
    %1225 = vmatpush1.msra.mxu0 %v1083
    %1226 = vmatprep.subr.mxu0 %v1088
    %1227 = vmatpush1.msra.mxu0 %v1087
    %1228 = vmatprep.subr.mxu0 %v1092
    %1229 = vmatpush1.msra.mxu0 %v1091
    %1230 = vmatprep.subr.mxu0 %v1096
    %1231 = vmatpush1.msra.mxu0 %v1095
    %1232 = vmatprep.subr.mxu0 %v1100
    %1233 = vmatpush1.msra.mxu0 %v1099
    %1234 = vmatprep.subr.mxu0 0.0
    %1235 = vmatpush1.msra.mxu0 0.0
    %1236 = vmatprep.subr.mxu0 0.0
    %1237 = vmatpush1.msra.mxu0 0.0
    %1238 = vmatprep.subr.mxu0 0.0
    %1239 = vmatpush1.msra.mxu0 0.0
    %1240 = vmatprep.subr.mxu0 0.0
    %1241 = vmatpush1.msra.mxu0 0.0
    %1242 = vmatprep.subr.mxu0 0.0
    %1243 = vmatpush1.msra.mxu0 0.0
    %1244 = vmatprep.subr.mxu0 0.0
    %1245 = vmatpush1.msra.mxu0 0.0
    %1246 = vmatprep.subr.mxu0 0.0
    %1247 = vmatpush1.msra.mxu0 0.0
    %1248 = vmatprep.subr.mxu0 0.0
    %1249 = vmatpush1.msra.mxu0 0.0
    %1250 = vmatprep.subr.mxu0 0.0
    %1251 = vmatpush1.msra.mxu0 0.0
    %1252 = vmatprep.subr.mxu0 0.0
    %1253 = vmatpush1.msra.mxu0 0.0
    %1254 = vmatprep.subr.mxu0 0.0
    %1255 = vmatpush1.msra.mxu0 0.0
    %1256 = vmatprep.subr.mxu0 0.0
    %1257 = vmatpush1.msra.mxu0 0.0
    %1258 = vmatprep.subr.mxu0 0.0
    %1259 = vmatpush1.msra.mxu0 0.0
    %1260 = vmatprep.subr.mxu0 0.0
    %1261 = vmatpush1.msra.mxu0 0.0
    %1262 = vmatprep.subr.mxu0 0.0
    %1263 = vmatpush1.msra.mxu0 0.0
    %1264 = vmatprep.subr.mxu0 0.0
    %1265 = vmatpush1.msra.mxu0 0.0
    %1266 = vmatprep.mubr.f32.mxu0 0.0
    %1267 = vmatmul.mubr.f32.gmra.mrb[0].mxu0 %v331
    %v1268 = vpop.f32.mrb[0].mxu0
    %v1269 = vadd.f32 0.0, %v1268
    %v1270 = vpop.f32.mrb[0].mxu0
    %v1271 = vadd.f32 0.0, %v1270
    %1272 = vmatprep.mubr.f32.mxu0 0.0
    %1273 = vmatmul.mubr.f32.gmra.mrb[0].mxu0 %v332
    %v1274 = vpop.f32.mrb[0].mxu0
    %v1275 = vadd.f32 0.0, %v1274
    %v1276 = vpop.f32.mrb[0].mxu0
    %v1277 = vadd.f32 0.0, %v1276
    %1278 = vmatprep.mubr.f32.mxu0 0.0
    %1279 = vmatmul.mubr.f32.gmra.mrb[0].mxu0 %v333
    %v1280 = vpop.f32.mrb[0].mxu0
    %v1281 = vadd.f32 0.0, %v1280
    %v1282 = vpop.f32.mrb[0].mxu0
    %v1283 = vadd.f32 0.0, %v1282
    %1284 = vmatprep.mubr.f32.mxu0 0.0
    %1285 = vmatmul.mubr.f32.gmra.mrb[0].mxu0 %v334
    %v1286 = vpop.f32.mrb[0].mxu0
    %v1287 = vadd.f32 0.0, %v1286
    %v1288 = vpop.f32.mrb[0].mxu0
    %v1289 = vadd.f32 0.0, %v1288
    %1290 = vmatprep.mubr.f32.mxu0 0.0
    %1291 = vmatmul.mubr.f32.gmra.mrb[0].mxu0 %v335
    %v1292 = vpop.f32.mrb[0].mxu0
    %v1293 = vadd.f32 0.0, %v1292
    %v1294 = vpop.f32.mrb[0].mxu0
    %v1295 = vadd.f32 0.0, %v1294
    %1296 = vmatprep.mubr.f32.mxu0 0.0
    %1297 = vmatmul.mubr.f32.gmra.mrb[0].mxu0 %v336
    %v1298 = vpop.f32.mrb[0].mxu0
    %v1299 = vadd.f32 0.0, %v1298
    %v1300 = vpop.f32.mrb[0].mxu0
    %v1301 = vadd.f32 0.0, %v1300
    %1302 = vdwg.mxu0
    %v1303 = vadd.f32 %v1012, %v1168
    %v1304 = vadd.f32 %v1013, %v1170
    %v1305 = vadd.f32 %v1014, %v1269
    %v1306 = vadd.f32 %v1015, %v1271
    %v1307 = vadd.f32 %v1016, %v1174
    %v1308 = vadd.f32 %v1017, %v1176
    %v1309 = vadd.f32 %v1018, %v1275
    %v1310 = vadd.f32 %v1019, %v1277
    %v1311 = vadd.f32 %v1020, %v1180
    %v1312 = vadd.f32 %v1021, %v1182
    %v1313 = vadd.f32 %v1022, %v1281
    %v1314 = vadd.f32 %v1023, %v1283
    %v1315 = vadd.f32 %v1024, %v1186
    %v1316 = vadd.f32 %v1025, %v1188
    %v1317 = vadd.f32 %v1026, %v1287
    %v1318 = vadd.f32 %v1027, %v1289
    %v1319 = vadd.f32 %v1028, %v1192
    %v1320 = vadd.f32 %v1029, %v1194
    %v1321 = vadd.f32 %v1030, %v1293
    %v1322 = vadd.f32 %v1031, %v1295
    %v1323 = vadd.f32 %v1032, %v1198
    %v1324 = vadd.f32 %v1033, %v1200
    %v1325 = vadd.f32 %v1034, %v1299
    %v1326 = vadd.f32 %v1035, %v1301
    %1327 = vst [vmem:[%s4] sm:$0xff] %v1303
    %1328 = vst [vmem:[%s4 + $0x8] sm:$0xff] %v1304
    %1329 = vst [vmem:[%s4 + $0x10] sm:$0xff] %v1305
    %1330 = vst [vmem:[%s4 + $0x18] sm:$0xff] %v1306
    %1331 = vst [vmem:[%s4 + $0x20] sm:$0xff] %v1307
    %1332 = vst [vmem:[%s4 + $0x28] sm:$0xff] %v1308
    %1333 = vst [vmem:[%s4 + $0x30] sm:$0xff] %v1309
    %1334 = vst [vmem:[%s4 + $0x38] sm:$0xff] %v1310
    %1335 = vst [vmem:[%s4 + $0x40] sm:$0xff] %v1311
    %1336 = vst [vmem:[%s4 + $0x48] sm:$0xff] %v1312
    %1337 = vst [vmem:[%s4 + $0x50] sm:$0xff] %v1313
    %1338 = vst [vmem:[%s4 + $0x58] sm:$0xff] %v1314
    %1339 = vst [vmem:[%s4 + $0x60] sm:$0xff] %v1315
    %1340 = vst [vmem:[%s4 + $0x68] sm:$0xff] %v1316
    %1341 = vst [vmem:[%s4 + $0x70] sm:$0xff] %v1317
    %1342 = vst [vmem:[%s4 + $0x78] sm:$0xff] %v1318
    %1343 = vst [vmem:[%s4 + $0x80] sm:$0xff] %v1319
    %1344 = vst [vmem:[%s4 + $0x88] sm:$0xff] %v1320
    %1345 = vst [vmem:[%s4 + $0x90] sm:$0xff] %v1321
    %1346 = vst [vmem:[%s4 + $0x98] sm:$0xff] %v1322
    %1347 = vst [vmem:[%s4 + $0xa0] sm:$0xff] %v1323
    %1348 = vst [vmem:[%s4 + $0xa8] sm:$0xff] %v1324
    %1349 = vst [vmem:[%s4 + $0xb0] sm:$0xff] %v1325
    %1350 = vst [vmem:[%s4 + $0xb8] sm:$0xff] %v1326
    // Predicated region
    $region22: #{model_forward.1} parent=1 // pred_check
      _
    $region23: #{model_forward.1} parent=1 // pred_check_branch
      %1352 = sbr.rel (0) target = $region25
    $region24: #{model_forward.1} parent=1 // pred_region
      _
    $region25: #{model_forward.1} parent=1 // pred_fallthru
      _
    // Predicated region
    $region26: #{model_forward.1} parent=1 // pred_check
      _
    $region27: #{model_forward.1} parent=1 // pred_check_branch
      %1354 = sbr.rel (0) target = $region29
    $region28: #{model_forward.1} parent=1 // pred_region
      _
    $region29: #{model_forward.1} parent=1 // pred_fallthru
      _
    %1355 = vsyncpa [#allocation3], 1

</llo_original>
